<compile_context>
chip_gen: v6e
topology: v6e:2x2x1
jax: 0.10.0
libtpu: 0.0.40
codegen_flags: <defaults>
</compile_context>

<pallas_src>
import jax
import jax.numpy as jnp
from jax import lax
from jax.experimental import pallas as pl
from jax.experimental.pallas import tpu as pltpu


# ----------------------------- fused kernel --------------------------------

def _net_kernel(x_ref, w1_ref, b1_ref, w2_ref, b2_ref,
                wf1_ref, bf1_ref, wf2_ref, bf2_ref, o_ref, a1_ref):
    """Whole Net forward for one batch tile; all intermediates stay in VMEM."""
    TB = x_ref.shape[1]                               # batch tile (multiple of 16)

    # ---- conv1 (1->10, k=5, valid): ONE K=140 MXU matmul ----
    xs = x_ref[...].reshape(24 * TB, 140)                                  # bf16
    c1 = jnp.dot(xs, w1_ref[...], preferred_element_type=jnp.float32)     # (24*TB, 256)

    # ---- fused maxpool(2) + bias + relu, no sub-vreg lane ops ----
    # H-pool = max of adjacent TB-row blocks; W-pool = max of the two
    # vreg-aligned 128-lane halves (even/odd w0 live in separate halves),
    # which lands the result already compacted at lane = w*10 + c.
    b1 = jnp.broadcast_to(b1_ref[...], (TB, 128))
    for h in range(12):
        top = c1[(2 * h) * TB:(2 * h + 1) * TB, :]
        bot = c1[(2 * h + 1) * TB:(2 * h + 2) * TB, :]
        hm = jnp.maximum(top, bot)                                         # (TB, 256)
        wm = jnp.maximum(hm[:, :128], hm[:, 128:])                         # (TB, 128)
        val = jnp.maximum(wm + b1, 0.0).astype(jnp.bfloat16)
        # scatter into conv2's K-pre-concatenated LHS (all offsets vreg-aligned)
        for ki in range(5):
            h0 = h - ki
            if 0 <= h0 < 8:
                a1_ref[h0 * TB:(h0 + 1) * TB, ki * 128:(ki + 1) * 128] = val

    # ---- conv2 (10->20, k=5, valid): ONE K=640 MXU matmul ----
    c2 = jnp.dot(a1_ref[...], w2_ref[...], preferred_element_type=jnp.float32)  # (8*TB, 256)
    # TODO(synk): nn.Dropout2d after conv2 is identity in eval mode.

    # ---- fused maxpool(2) + bias + relu + (h,w,c) flatten ----
    b2 = jnp.broadcast_to(b2_ref[...], (TB, 128))
    parts = []
    for h in range(4):
        top = c2[(2 * h) * TB:(2 * h + 1) * TB, :]
        bot = c2[(2 * h + 1) * TB:(2 * h + 2) * TB, :]
        hm = jnp.maximum(top, bot)                                         # (TB, 256)
        wm = jnp.maximum(hm[:, :128], hm[:, 128:])                         # (TB, 128)
        parts.append(jnp.maximum(wm + b2, 0.0).astype(jnp.bfloat16))
    flat = jnp.concatenate(parts, axis=-1)                                 # (TB, 512)

    # ---- fc1 + relu + fc2 + log_softmax (128-lane padded; pad logits -1e30) ----
    h1 = jnp.dot(flat, wf1_ref[...], preferred_element_type=jnp.float32) + bf1_ref[...]
    h1 = jnp.maximum(h1, 0.0)
    # TODO(synk): F.dropout(p=0.5) between fc1 and fc2 is identity in eval mode.
    logits = jnp.dot(h1.astype(jnp.bfloat16), wf2_ref[...],
                     preferred_element_type=jnp.float32) + bf2_ref[...]    # (TB, 128)
    m = jnp.max(logits, axis=1, keepdims=True)
    s = logits - m
    lse = jnp.log(jnp.sum(jnp.exp(s), axis=1, keepdims=True))
    o_ref[...] = s - lse


# -------------------------- weight repacking glue ---------------------------

def _round_up(n, m):
    return (n + m - 1) // m * m


def _conv1_mat(w):
    """(10,1,5,5) -> (140,256): A[ki*28+w0+kj, (w0%2)*128+(w0//2)*10+co] = w[co,0,ki,kj]."""
    ki, kj, co, w0 = jnp.meshgrid(jnp.arange(5), jnp.arange(5),
                                  jnp.arange(10), jnp.arange(24), indexing="ij")
    A = jnp.zeros((140, 256), jnp.float32)
    A = A.at[ki * 28 + w0 + kj, (w0 % 2) * 128 + (w0 // 2) * 10 + co].set(w[co, 0, ki, kj])
    return A.astype(jnp.bfloat16)


def _conv2_mat(w):
    """(20,10,5,5) -> (640,256): A[ki*128+(w0+kj)*10+ci, (w0%2)*128+(w0//2)*20+co] = w[co,ci,ki,kj]."""
    ki, kj, ci, co, w0 = jnp.meshgrid(jnp.arange(5), jnp.arange(5), jnp.arange(10),
                                      jnp.arange(20), jnp.arange(8), indexing="ij")
    A = jnp.zeros((640, 256), jnp.float32)
    A = A.at[ki * 128 + (w0 + kj) * 10 + ci,
             (w0 % 2) * 128 + (w0 // 2) * 20 + co].set(w[co, ci, ki, kj])
    return A.astype(jnp.bfloat16)


def _fc1_mat(w):
    """(50,320) PyTorch (c,h,w) flatten -> (512,128) with rows at lane h*128 + w*20 + c."""
    wt = jnp.transpose(w.reshape(50, 20, 4, 4), (1, 2, 3, 0)).reshape(320, 50)  # (c,h,w) major
    c, h, j = jnp.meshgrid(jnp.arange(20), jnp.arange(4), jnp.arange(4), indexing="ij")
    rows = (h * 128 + j * 20 + c).reshape(-1)
    A = jnp.zeros((512, 128), jnp.float32)
    A = A.at[rows, :50].set(wt)
    return A.astype(jnp.bfloat16)


def _fc2_mat(w):
    """(10,50) -> (128,128) zero-padded transpose."""
    A = jnp.zeros((128, 128), jnp.float32)
    A = A.at[:50, :10].set(jnp.transpose(w))
    return A.astype(jnp.bfloat16)


def _lane_bias(b, group, valid):
    """Per-lane bias for the pooled layout lane = w*group + c (valid lanes < `valid`)."""
    lane = jnp.arange(128)
    return jnp.where(lane < valid, b[lane % group], 0.0).reshape(1, 128).astype(jnp.float32)


def _full_spec(shape):
    n = len(shape)
    return pl.BlockSpec(shape, lambda i: (0,) * n)


# ------------------------------- forward -----------------------------------

def net_forward(x_nchw, params, *, tile_b=None):
    B = x_nchw.shape[0]
    if tile_b is None:
        # Big tiles amortise the ~0.35us/step pipeline overhead; keep grid >= 2
        # when the batch allows so v7x megacore can split the "parallel" axis.
        tile_b = min(128, max(16, _round_up((B + 1) // 2, 16)))
    TB = int(tile_b)
    assert TB % 16 == 0, "batch tile must be a multiple of 16"
    Bp = _round_up(B, TB)

    # Input plumbing: squeeze channel, pad batch, H-band expand so conv1 is a
    # single K=140 matmul (lane = ki*28 + w), ship as bf16 with batch on sublanes.
    x = x_nchw[:, 0, :, :].astype(jnp.float32)                       # (B, 28, 28)
    if Bp != B:
        x = jnp.pad(x, ((0, Bp - B), (0, 0), (0, 0)))
    xb = jnp.concatenate([x[:, ki:ki + 24, :] for ki in range(5)], axis=-1)   # (Bp, 24, 140)
    xb = jnp.transpose(xb, (1, 0, 2)).astype(jnp.bfloat16)           # (24, Bp, 140)

    # One-time weight repacking (tiny, plain JAX).
    w1 = _conv1_mat(params["conv1_w"])
    b1 = _lane_bias(params["conv1_b"], group=10, valid=120)
    w2 = _conv2_mat(params["conv2_w"])
    b2 = _lane_bias(params["conv2_b"], group=20, valid=80)
    wf1 = _fc1_mat(params["fc1_w"])
    bf1 = jnp.zeros((1, 128), jnp.float32).at[0, :50].set(params["fc1_b"])
    wf2 = _fc2_mat(params["fc2_w"])
    bf2 = jnp.full((1, 128), -1e30, jnp.float32).at[0, :10].set(params["fc2_b"])

    out = pl.pallas_call(
        _net_kernel,
        out_shape=jax.ShapeDtypeStruct((Bp, 128), jnp.float32),
        grid_spec=pltpu.PrefetchScalarGridSpec(
            num_scalar_prefetch=0,
            grid=(Bp // TB,),
            in_specs=[
                pl.BlockSpec((24, TB, 140), lambda i: (0, i, 0)),    # banded input tile
                _full_spec((140, 256)), _full_spec((1, 128)),        # conv1
                _full_spec((640, 256)), _full_spec((1, 128)),        # conv2
                _full_spec((512, 128)), _full_spec((1, 128)),        # fc1
                _full_spec((128, 128)), _full_spec((1, 128)),        # fc2
            ],
            out_specs=pl.BlockSpec((TB, 128), lambda i: (i, 0)),
            scratch_shapes=[pltpu.VMEM((8 * TB, 640), jnp.bfloat16)],
        ),
        compiler_params=pltpu.CompilerParams(
            dimension_semantics=("parallel",),
            vmem_limit_bytes=32 * 1024 * 1024),
    )(xb, w1, b1, w2, b2, wf1, bf1, wf2, bf2)
    return out[:B, :10]


# --------------------------- pure-JAX reference -----------------------------

def _maxpool2_nchw(x):
    return jnp.maximum(jnp.maximum(x[:, :, 0::2, 0::2], x[:, :, 0::2, 1::2]),
                       jnp.maximum(x[:, :, 1::2, 0::2], x[:, :, 1::2, 1::2]))


def net_forward_reference(x_nchw, params):
    """f32 reference with PyTorch eval-mode semantics."""
    dn = ("NCHW", "OIHW", "NCHW")
    c1 = lax.conv_general_dilated(x_nchw, params["conv1_w"], (1, 1), "VALID",
                                  dimension_numbers=dn)
    c1 = c1 + params["conv1_b"][None, :, None, None]
    a1 = jnp.maximum(_maxpool2_nchw(c1), 0.0)
    c2 = lax.conv_general_dilated(a1, params["conv2_w"], (1, 1), "VALID",
                                  dimension_numbers=dn)
    c2 = c2 + params["conv2_b"][None, :, None, None]
    a2 = jnp.maximum(_maxpool2_nchw(c2), 0.0)
    flat = a2.reshape(a2.shape[0], 320)               # PyTorch view(-1, 320)
    h = jnp.maximum(flat @ params["fc1_w"].T + params["fc1_b"], 0.0)
    logits = h @ params["fc2_w"].T + params["fc2_b"]
    return jax.nn.log_softmax(logits, axis=1)


# --------------------------------- params -----------------------------------

def init_params(key):
    ks = jax.random.split(key, 8)

    def u(k, shape, fan_in):
        bound = 1.0 / (fan_in ** 0.5)
        return jax.random.uniform(k, shape, jnp.float32, -bound, bound)

    return dict(
        conv1_w=u(ks[0], (10, 1, 5, 5), 25),
        conv1_b=u(ks[1], (10,), 25),
        conv2_w=u(ks[2], (20, 10, 5, 5), 250),
        conv2_b=u(ks[3], (20,), 250),
        fc1_w=u(ks[4], (50, 320), 320),
        fc1_b=u(ks[5], (50,), 320),
        fc2_w=u(ks[6], (10, 50), 50),
        fc2_b=u(ks[7], (10,), 50),
    )


if __name__ == "__main__":
    key = jax.random.PRNGKey(0)
    k_x, k_p = jax.random.split(key)
    x = jax.random.normal(k_x, (2, 1, 28, 28), dtype=jnp.float32)  # NCHW MNIST
    params = init_params(k_p)

    out = jax.block_until_ready(jax.jit(net_forward)(x, params))
    assert out.shape == (2, 10), out.shape

    # log_softmax rows must exponentiate-sum to ~1
    row_sums = jnp.exp(out).sum(axis=1)
    assert bool(jnp.all(jnp.abs(row_sums - 1.0) < 1e-3)), row_sums

    # compare against the f32 reference (kernel matmuls run in bf16)
    ref = jax.block_until_ready(jax.jit(net_forward_reference)(x, params))
    err = float(jnp.max(jnp.abs(out - ref)))
    assert err < 0.2, f"max |diff| vs reference = {err}"

    print("KERNEL_OK")
</pallas_src>

<mosaic_0001>
module attributes {stable_mosaic.version = 11 : i64} {
  func.func @_net_kernel(%arg0: i32, %arg1: memref<24x16x140xbf16, #tpu.memory_space<vmem>>, %arg2: memref<140x256xbf16, #tpu.memory_space<vmem>>, %arg3: memref<1x128xf32, #tpu.memory_space<vmem>>, %arg4: memref<640x256xbf16, #tpu.memory_space<vmem>>, %arg5: memref<1x128xf32, #tpu.memory_space<vmem>>, %arg6: memref<512x128xbf16, #tpu.memory_space<vmem>>, %arg7: memref<1x128xf32, #tpu.memory_space<vmem>>, %arg8: memref<128x128xbf16, #tpu.memory_space<vmem>>, %arg9: memref<1x128xf32, #tpu.memory_space<vmem>>, %arg10: memref<16x128xf32, #tpu.memory_space<vmem>>, %arg11: memref<128x640xbf16, #tpu.memory_space<vmem>>) attributes {dimension_semantics = [#tpu.dimension_semantics<parallel>], iteration_bounds = array<i64: 1>, scalar_prefetch = 0 : i64, scratch_operands = 1 : i64, tpu.core_type = #tpu.core_type<tc>, window_params = [{transform_indices = @transform_0, window_bounds = array<i64: 24, 16, 140>}, {pipeline_mode = #tpu.pipeline_mode<synchronous>, transform_indices = @transform_1, window_bounds = array<i64: 140, 256>}, {pipeline_mode = #tpu.pipeline_mode<synchronous>, transform_indices = @transform_2, window_bounds = array<i64: 1, 128>}, {pipeline_mode = #tpu.pipeline_mode<synchronous>, transform_indices = @transform_3, window_bounds = array<i64: 640, 256>}, {pipeline_mode = #tpu.pipeline_mode<synchronous>, transform_indices = @transform_4, window_bounds = array<i64: 1, 128>}, {pipeline_mode = #tpu.pipeline_mode<synchronous>, transform_indices = @transform_5, window_bounds = array<i64: 512, 128>}, {pipeline_mode = #tpu.pipeline_mode<synchronous>, transform_indices = @transform_6, window_bounds = array<i64: 1, 128>}, {pipeline_mode = #tpu.pipeline_mode<synchronous>, transform_indices = @transform_7, window_bounds = array<i64: 128, 128>}, {pipeline_mode = #tpu.pipeline_mode<synchronous>, transform_indices = @transform_8, window_bounds = array<i64: 1, 128>}, {transform_indices = @transform_9, window_bounds = array<i64: 16, 128>}]} {
    %c0 = arith.constant 0 : index
    %c0_0 = arith.constant 0 : index
    %c0_1 = arith.constant 0 : index
    %0 = vector.load %arg1[%c0, %c0_0, %c0_1] : memref<24x16x140xbf16, #tpu.memory_space<vmem>>, vector<24x16x140xbf16>
    %1 = vector.shape_cast %0 : vector<24x16x140xbf16> to vector<384x140xbf16>
    %c0_2 = arith.constant 0 : index
    %c0_3 = arith.constant 0 : index
    %2 = vector.load %arg2[%c0_2, %c0_3] : memref<140x256xbf16, #tpu.memory_space<vmem>>, vector<140x256xbf16>
    %cst = arith.constant dense<0.000000e+00> : vector<384x256xf32>
    %3 = tpu.matmul %1, %2, %cst {dimension_numbers = #tpu.dot_dimension_numbers<[1], [0], [0], [1], [0, 0, 1, 1], [], []>} : vector<384x140xbf16>, vector<140x256xbf16>, vector<384x256xf32> -> vector<384x256xf32>
    %c0_4 = arith.constant 0 : index
    %c0_5 = arith.constant 0 : index
    %4 = vector.load %arg3[%c0_4, %c0_5] : memref<1x128xf32, #tpu.memory_space<vmem>>, vector<1x128xf32>
    %5 = vector.shape_cast %4 : vector<1x128xf32> to vector<1x128xf32>
    %6 = vector.broadcast %5 : vector<1x128xf32> to vector<16x128xf32>
    %7 = vector.extract_strided_slice %3 {offsets = [0, 0], sizes = [16, 256], strides = [1, 1]} : vector<384x256xf32> to vector<16x256xf32>
    %8 = vector.extract_strided_slice %3 {offsets = [16, 0], sizes = [16, 256], strides = [1, 1]} : vector<384x256xf32> to vector<16x256xf32>
    %9 = arith.maximumf %7, %8 : vector<16x256xf32>
    %10 = vector.extract_strided_slice %9 {offsets = [0, 0], sizes = [16, 128], strides = [1, 1]} : vector<16x256xf32> to vector<16x128xf32>
    %11 = vector.extract_strided_slice %9 {offsets = [0, 128], sizes = [16, 128], strides = [1, 1]} : vector<16x256xf32> to vector<16x128xf32>
    %12 = arith.maximumf %10, %11 : vector<16x128xf32>
    %13 = arith.addf %12, %6 : vector<16x128xf32>
    %cst_6 = arith.constant 0.000000e+00 : f32
    %14 = vector.broadcast %cst_6 : f32 to vector<16x128xf32>
    %15 = arith.maximumf %13, %14 : vector<16x128xf32>
    %16 = arith.truncf %15 : vector<16x128xf32> to vector<16x128xbf16>
    %c0_7 = arith.constant 0 : index
    %c0_8 = arith.constant 0 : index
    %17 = vector.load %arg11[%c0_7, %c0_8] : memref<128x640xbf16, #tpu.memory_space<vmem>>, vector<16x128xbf16>
    tpu.vector_store %arg11[%c0_7, %c0_8], %16 {strides = array<i32>} : memref<128x640xbf16, #tpu.memory_space<vmem>>, vector<16x128xbf16>,
    %18 = vector.extract_strided_slice %3 {offsets = [32, 0], sizes = [16, 256], strides = [1, 1]} : vector<384x256xf32> to vector<16x256xf32>
    %19 = vector.extract_strided_slice %3 {offsets = [48, 0], sizes = [16, 256], strides = [1, 1]} : vector<384x256xf32> to vector<16x256xf32>
    %20 = arith.maximumf %18, %19 : vector<16x256xf32>
    %21 = vector.extract_strided_slice %20 {offsets = [0, 0], sizes = [16, 128], strides = [1, 1]} : vector<16x256xf32> to vector<16x128xf32>
    %22 = vector.extract_strided_slice %20 {offsets = [0, 128], sizes = [16, 128], strides = [1, 1]} : vector<16x256xf32> to vector<16x128xf32>
    %23 = arith.maximumf %21, %22 : vector<16x128xf32>
    %24 = arith.addf %23, %6 : vector<16x128xf32>
    %cst_9 = arith.constant 0.000000e+00 : f32
    %25 = vector.broadcast %cst_9 : f32 to vector<16x128xf32>
    %26 = arith.maximumf %24, %25 : vector<16x128xf32>
    %27 = arith.truncf %26 : vector<16x128xf32> to vector<16x128xbf16>
    %c16 = arith.constant 16 : index
    %c0_10 = arith.constant 0 : index
    %28 = vector.load %arg11[%c16, %c0_10] : memref<128x640xbf16, #tpu.memory_space<vmem>>, vector<16x128xbf16>
    tpu.vector_store %arg11[%c16, %c0_10], %27 {strides = array<i32>} : memref<128x640xbf16, #tpu.memory_space<vmem>>, vector<16x128xbf16>,
    %c0_11 = arith.constant 0 : index
    %c128 = arith.constant 128 : index
    %29 = vector.load %arg11[%c0_11, %c128] : memref<128x640xbf16, #tpu.memory_space<vmem>>, vector<16x128xbf16>
    tpu.vector_store %arg11[%c0_11, %c128], %27 {strides = array<i32>} : memref<128x640xbf16, #tpu.memory_space<vmem>>, vector<16x128xbf16>,
    %30 = vector.extract_strided_slice %3 {offsets = [64, 0], sizes = [16, 256], strides = [1, 1]} : vector<384x256xf32> to vector<16x256xf32>
    %31 = vector.extract_strided_slice %3 {offsets = [80, 0], sizes = [16, 256], strides = [1, 1]} : vector<384x256xf32> to vector<16x256xf32>
    %32 = arith.maximumf %30, %31 : vector<16x256xf32>
    %33 = vector.extract_strided_slice %32 {offsets = [0, 0], sizes = [16, 128], strides = [1, 1]} : vector<16x256xf32> to vector<16x128xf32>
    %34 = vector.extract_strided_slice %32 {offsets = [0, 128], sizes = [16, 128], strides = [1, 1]} : vector<16x256xf32> to vector<16x128xf32>
    %35 = arith.maximumf %33, %34 : vector<16x128xf32>
    %36 = arith.addf %35, %6 : vector<16x128xf32>
    %cst_12 = arith.constant 0.000000e+00 : f32
    %37 = vector.broadcast %cst_12 : f32 to vector<16x128xf32>
    %38 = arith.maximumf %36, %37 : vector<16x128xf32>
    %39 = arith.truncf %38 : vector<16x128xf32> to vector<16x128xbf16>
    %c32 = arith.constant 32 : index
    %c0_13 = arith.constant 0 : index
    %40 = vector.load %arg11[%c32, %c0_13] : memref<128x640xbf16, #tpu.memory_space<vmem>>, vector<16x128xbf16>
    tpu.vector_store %arg11[%c32, %c0_13], %39 {strides = array<i32>} : memref<128x640xbf16, #tpu.memory_space<vmem>>, vector<16x128xbf16>,
    %c16_14 = arith.constant 16 : index
    %c128_15 = arith.constant 128 : index
    %41 = vector.load %arg11[%c16_14, %c128_15] : memref<128x640xbf16, #tpu.memory_space<vmem>>, vector<16x128xbf16>
    tpu.vector_store %arg11[%c16_14, %c128_15], %39 {strides = array<i32>} : memref<128x640xbf16, #tpu.memory_space<vmem>>, vector<16x128xbf16>,
    %c0_16 = arith.constant 0 : index
    %c256 = arith.constant 256 : index
    %42 = vector.load %arg11[%c0_16, %c256] : memref<128x640xbf16, #tpu.memory_space<vmem>>, vector<16x128xbf16>
    tpu.vector_store %arg11[%c0_16, %c256], %39 {strides = array<i32>} : memref<128x640xbf16, #tpu.memory_space<vmem>>, vector<16x128xbf16>,
    %43 = vector.extract_strided_slice %3 {offsets = [96, 0], sizes = [16, 256], strides = [1, 1]} : vector<384x256xf32> to vector<16x256xf32>
    %44 = vector.extract_strided_slice %3 {offsets = [112, 0], sizes = [16, 256], strides = [1, 1]} : vector<384x256xf32> to vector<16x256xf32>
    %45 = arith.maximumf %43, %44 : vector<16x256xf32>
    %46 = vector.extract_strided_slice %45 {offsets = [0, 0], sizes = [16, 128], strides = [1, 1]} : vector<16x256xf32> to vector<16x128xf32>
    %47 = vector.extract_strided_slice %45 {offsets = [0, 128], sizes = [16, 128], strides = [1, 1]} : vector<16x256xf32> to vector<16x128xf32>
    %48 = arith.maximumf %46, %47 : vector<16x128xf32>
    %49 = arith.addf %48, %6 : vector<16x128xf32>
    %cst_17 = arith.constant 0.000000e+00 : f32
    %50 = vector.broadcast %cst_17 : f32 to vector<16x128xf32>
    %51 = arith.maximumf %49, %50 : vector<16x128xf32>
    %52 = arith.truncf %51 : vector<16x128xf32> to vector<16x128xbf16>
    %c48 = arith.constant 48 : index
    %c0_18 = arith.constant 0 : index
    %53 = vector.load %arg11[%c48, %c0_18] : memref<128x640xbf16, #tpu.memory_space<vmem>>, vector<16x128xbf16>
    tpu.vector_store %arg11[%c48, %c0_18], %52 {strides = array<i32>} : memref<128x640xbf16, #tpu.memory_space<vmem>>, vector<16x128xbf16>,
    %c32_19 = arith.constant 32 : index
    %c128_20 = arith.constant 128 : index
    %54 = vector.load %arg11[%c32_19, %c128_20] : memref<128x640xbf16, #tpu.memory_space<vmem>>, vector<16x128xbf16>
    tpu.vector_store %arg11[%c32_19, %c128_20], %52 {strides = array<i32>} : memref<128x640xbf16, #tpu.memory_space<vmem>>, vector<16x128xbf16>,
    %c16_21 = arith.constant 16 : index
    %c256_22 = arith.constant 256 : index
    %55 = vector.load %arg11[%c16_21, %c256_22] : memref<128x640xbf16, #tpu.memory_space<vmem>>, vector<16x128xbf16>
    tpu.vector_store %arg11[%c16_21, %c256_22], %52 {strides = array<i32>} : memref<128x640xbf16, #tpu.memory_space<vmem>>, vector<16x128xbf16>,
    %c0_23 = arith.constant 0 : index
    %c384 = arith.constant 384 : index
    %56 = vector.load %arg11[%c0_23, %c384] : memref<128x640xbf16, #tpu.memory_space<vmem>>, vector<16x128xbf16>
    tpu.vector_store %arg11[%c0_23, %c384], %52 {strides = array<i32>} : memref<128x640xbf16, #tpu.memory_space<vmem>>, vector<16x128xbf16>,
    %57 = vector.extract_strided_slice %3 {offsets = [128, 0], sizes = [16, 256], strides = [1, 1]} : vector<384x256xf32> to vector<16x256xf32>
    %58 = vector.extract_strided_slice %3 {offsets = [144, 0], sizes = [16, 256], strides = [1, 1]} : vector<384x256xf32> to vector<16x256xf32>
    %59 = arith.maximumf %57, %58 : vector<16x256xf32>
    %60 = vector.extract_strided_slice %59 {offsets = [0, 0], sizes = [16, 128], strides = [1, 1]} : vector<16x256xf32> to vector<16x128xf32>
    %61 = vector.extract_strided_slice %59 {offsets = [0, 128], sizes = [16, 128], strides = [1, 1]} : vector<16x256xf32> to vector<16x128xf32>
    %62 = arith.maximumf %60, %61 : vector<16x128xf32>
    %63 = arith.addf %62, %6 : vector<16x128xf32>
    %cst_24 = arith.constant 0.000000e+00 : f32
    %64 = vector.broadcast %cst_24 : f32 to vector<16x128xf32>
    %65 = arith.maximumf %63, %64 : vector<16x128xf32>
    %66 = arith.truncf %65 : vector<16x128xf32> to vector<16x128xbf16>
    %c64 = arith.constant 64 : index
    %c0_25 = arith.constant 0 : index
    %67 = vector.load %arg11[%c64, %c0_25] : memref<128x640xbf16, #tpu.memory_space<vmem>>, vector<16x128xbf16>
    tpu.vector_store %arg11[%c64, %c0_25], %66 {strides = array<i32>} : memref<128x640xbf16, #tpu.memory_space<vmem>>, vector<16x128xbf16>,
    %c48_26 = arith.constant 48 : index
    %c128_27 = arith.constant 128 : index
    %68 = vector.load %arg11[%c48_26, %c128_27] : memref<128x640xbf16, #tpu.memory_space<vmem>>, vector<16x128xbf16>
    tpu.vector_store %arg11[%c48_26, %c128_27], %66 {strides = array<i32>} : memref<128x640xbf16, #tpu.memory_space<vmem>>, vector<16x128xbf16>,
    %c32_28 = arith.constant 32 : index
    %c256_29 = arith.constant 256 : index
    %69 = vector.load %arg11[%c32_28, %c256_29] : memref<128x640xbf16, #tpu.memory_space<vmem>>, vector<16x128xbf16>
    tpu.vector_store %arg11[%c32_28, %c256_29], %66 {strides = array<i32>} : memref<128x640xbf16, #tpu.memory_space<vmem>>, vector<16x128xbf16>,
    %c16_30 = arith.constant 16 : index
    %c384_31 = arith.constant 384 : index
    %70 = vector.load %arg11[%c16_30, %c384_31] : memref<128x640xbf16, #tpu.memory_space<vmem>>, vector<16x128xbf16>
    tpu.vector_store %arg11[%c16_30, %c384_31], %66 {strides = array<i32>} : memref<128x640xbf16, #tpu.memory_space<vmem>>, vector<16x128xbf16>,
    %c0_32 = arith.constant 0 : index
    %c512 = arith.constant 512 : index
    %71 = vector.load %arg11[%c0_32, %c512] : memref<128x640xbf16, #tpu.memory_space<vmem>>, vector<16x128xbf16>
    tpu.vector_store %arg11[%c0_32, %c512], %66 {strides = array<i32>} : memref<128x640xbf16, #tpu.memory_space<vmem>>, vector<16x128xbf16>,
    %72 = vector.extract_strided_slice %3 {offsets = [160, 0], sizes = [16, 256], strides = [1, 1]} : vector<384x256xf32> to vector<16x256xf32>
    %73 = vector.extract_strided_slice %3 {offsets = [176, 0], sizes = [16, 256], strides = [1, 1]} : vector<384x256xf32> to vector<16x256xf32>
    %74 = arith.maximumf %72, %73 : vector<16x256xf32>
    %75 = vector.extract_strided_slice %74 {offsets = [0, 0], sizes = [16, 128], strides = [1, 1]} : vector<16x256xf32> to vector<16x128xf32>
    %76 = vector.extract_strided_slice %74 {offsets = [0, 128], sizes = [16, 128], strides = [1, 1]} : vector<16x256xf32> to vector<16x128xf32>
    %77 = arith.maximumf %75, %76 : vector<16x128xf32>
    %78 = arith.addf %77, %6 : vector<16x128xf32>
    %cst_33 = arith.constant 0.000000e+00 : f32
    %79 = vector.broadcast %cst_33 : f32 to vector<16x128xf32>
    %80 = arith.maximumf %78, %79 : vector<16x128xf32>
    %81 = arith.truncf %80 : vector<16x128xf32> to vector<16x128xbf16>
    %c80 = arith.constant 80 : index
    %c0_34 = arith.constant 0 : index
    %82 = vector.load %arg11[%c80, %c0_34] : memref<128x640xbf16, #tpu.memory_space<vmem>>, vector<16x128xbf16>
    tpu.vector_store %arg11[%c80, %c0_34], %81 {strides = array<i32>} : memref<128x640xbf16, #tpu.memory_space<vmem>>, vector<16x128xbf16>,
    %c64_35 = arith.constant 64 : index
    %c128_36 = arith.constant 128 : index
    %83 = vector.load %arg11[%c64_35, %c128_36] : memref<128x640xbf16, #tpu.memory_space<vmem>>, vector<16x128xbf16>
    tpu.vector_store %arg11[%c64_35, %c128_36], %81 {strides = array<i32>} : memref<128x640xbf16, #tpu.memory_space<vmem>>, vector<16x128xbf16>,
    %c48_37 = arith.constant 48 : index
    %c256_38 = arith.constant 256 : index
    %84 = vector.load %arg11[%c48_37, %c256_38] : memref<128x640xbf16, #tpu.memory_space<vmem>>, vector<16x128xbf16>
    tpu.vector_store %arg11[%c48_37, %c256_38], %81 {strides = array<i32>} : memref<128x640xbf16, #tpu.memory_space<vmem>>, vector<16x128xbf16>,
    %c32_39 = arith.constant 32 : index
    %c384_40 = arith.constant 384 : index
    %85 = vector.load %arg11[%c32_39, %c384_40] : memref<128x640xbf16, #tpu.memory_space<vmem>>, vector<16x128xbf16>
    tpu.vector_store %arg11[%c32_39, %c384_40], %81 {strides = array<i32>} : memref<128x640xbf16, #tpu.memory_space<vmem>>, vector<16x128xbf16>,
    %c16_41 = arith.constant 16 : index
    %c512_42 = arith.constant 512 : index
    %86 = vector.load %arg11[%c16_41, %c512_42] : memref<128x640xbf16, #tpu.memory_space<vmem>>, vector<16x128xbf16>
    tpu.vector_store %arg11[%c16_41, %c512_42], %81 {strides = array<i32>} : memref<128x640xbf16, #tpu.memory_space<vmem>>, vector<16x128xbf16>,
    %87 = vector.extract_strided_slice %3 {offsets = [192, 0], sizes = [16, 256], strides = [1, 1]} : vector<384x256xf32> to vector<16x256xf32>
    %88 = vector.extract_strided_slice %3 {offsets = [208, 0], sizes = [16, 256], strides = [1, 1]} : vector<384x256xf32> to vector<16x256xf32>
    %89 = arith.maximumf %87, %88 : vector<16x256xf32>
    %90 = vector.extract_strided_slice %89 {offsets = [0, 0], sizes = [16, 128], strides = [1, 1]} : vector<16x256xf32> to vector<16x128xf32>
    %91 = vector.extract_strided_slice %89 {offsets = [0, 128], sizes = [16, 128], strides = [1, 1]} : vector<16x256xf32> to vector<16x128xf32>
    %92 = arith.maximumf %90, %91 : vector<16x128xf32>
    %93 = arith.addf %92, %6 : vector<16x128xf32>
    %cst_43 = arith.constant 0.000000e+00 : f32
    %94 = vector.broadcast %cst_43 : f32 to vector<16x128xf32>
    %95 = arith.maximumf %93, %94 : vector<16x128xf32>
    %96 = arith.truncf %95 : vector<16x128xf32> to vector<16x128xbf16>
    %c96 = arith.constant 96 : index
    %c0_44 = arith.constant 0 : index
    %97 = vector.load %arg11[%c96, %c0_44] : memref<128x640xbf16, #tpu.memory_space<vmem>>, vector<16x128xbf16>
    tpu.vector_store %arg11[%c96, %c0_44], %96 {strides = array<i32>} : memref<128x640xbf16, #tpu.memory_space<vmem>>, vector<16x128xbf16>,
    %c80_45 = arith.constant 80 : index
    %c128_46 = arith.constant 128 : index
    %98 = vector.load %arg11[%c80_45, %c128_46] : memref<128x640xbf16, #tpu.memory_space<vmem>>, vector<16x128xbf16>
    tpu.vector_store %arg11[%c80_45, %c128_46], %96 {strides = array<i32>} : memref<128x640xbf16, #tpu.memory_space<vmem>>, vector<16x128xbf16>,
    %c64_47 = arith.constant 64 : index
    %c256_48 = arith.constant 256 : index
    %99 = vector.load %arg11[%c64_47, %c256_48] : memref<128x640xbf16, #tpu.memory_space<vmem>>, vector<16x128xbf16>
    tpu.vector_store %arg11[%c64_47, %c256_48], %96 {strides = array<i32>} : memref<128x640xbf16, #tpu.memory_space<vmem>>, vector<16x128xbf16>,
    %c48_49 = arith.constant 48 : index
    %c384_50 = arith.constant 384 : index
    %100 = vector.load %arg11[%c48_49, %c384_50] : memref<128x640xbf16, #tpu.memory_space<vmem>>, vector<16x128xbf16>
    tpu.vector_store %arg11[%c48_49, %c384_50], %96 {strides = array<i32>} : memref<128x640xbf16, #tpu.memory_space<vmem>>, vector<16x128xbf16>,
    %c32_51 = arith.constant 32 : index
    %c512_52 = arith.constant 512 : index
    %101 = vector.load %arg11[%c32_51, %c512_52] : memref<128x640xbf16, #tpu.memory_space<vmem>>, vector<16x128xbf16>
    tpu.vector_store %arg11[%c32_51, %c512_52], %96 {strides = array<i32>} : memref<128x640xbf16, #tpu.memory_space<vmem>>, vector<16x128xbf16>,
    %102 = vector.extract_strided_slice %3 {offsets = [224, 0], sizes = [16, 256], strides = [1, 1]} : vector<384x256xf32> to vector<16x256xf32>
    %103 = vector.extract_strided_slice %3 {offsets = [240, 0], sizes = [16, 256], strides = [1, 1]} : vector<384x256xf32> to vector<16x256xf32>
    %104 = arith.maximumf %102, %103 : vector<16x256xf32>
    %105 = vector.extract_strided_slice %104 {offsets = [0, 0], sizes = [16, 128], strides = [1, 1]} : vector<16x256xf32> to vector<16x128xf32>
    %106 = vector.extract_strided_slice %104 {offsets = [0, 128], sizes = [16, 128], strides = [1, 1]} : vector<16x256xf32> to vector<16x128xf32>
    %107 = arith.maximumf %105, %106 : vector<16x128xf32>
    %108 = arith.addf %107, %6 : vector<16x128xf32>
    %cst_53 = arith.constant 0.000000e+00 : f32
    %109 = vector.broadcast %cst_53 : f32 to vector<16x128xf32>
    %110 = arith.maximumf %108, %109 : vector<16x128xf32>
    %111 = arith.truncf %110 : vector<16x128xf32> to vector<16x128xbf16>
    %c112 = arith.constant 112 : index
    %c0_54 = arith.constant 0 : index
    %112 = vector.load %arg11[%c112, %c0_54] : memref<128x640xbf16, #tpu.memory_space<vmem>>, vector<16x128xbf16>
    tpu.vector_store %arg11[%c112, %c0_54], %111 {strides = array<i32>} : memref<128x640xbf16, #tpu.memory_space<vmem>>, vector<16x128xbf16>,
    %c96_55 = arith.constant 96 : index
    %c128_56 = arith.constant 128 : index
    %113 = vector.load %arg11[%c96_55, %c128_56] : memref<128x640xbf16, #tpu.memory_space<vmem>>, vector<16x128xbf16>
    tpu.vector_store %arg11[%c96_55, %c128_56], %111 {strides = array<i32>} : memref<128x640xbf16, #tpu.memory_space<vmem>>, vector<16x128xbf16>,
    %c80_57 = arith.constant 80 : index
    %c256_58 = arith.constant 256 : index
    %114 = vector.load %arg11[%c80_57, %c256_58] : memref<128x640xbf16, #tpu.memory_space<vmem>>, vector<16x128xbf16>
    tpu.vector_store %arg11[%c80_57, %c256_58], %111 {strides = array<i32>} : memref<128x640xbf16, #tpu.memory_space<vmem>>, vector<16x128xbf16>,
    %c64_59 = arith.constant 64 : index
    %c384_60 = arith.constant 384 : index
    %115 = vector.load %arg11[%c64_59, %c384_60] : memref<128x640xbf16, #tpu.memory_space<vmem>>, vector<16x128xbf16>
    tpu.vector_store %arg11[%c64_59, %c384_60], %111 {strides = array<i32>} : memref<128x640xbf16, #tpu.memory_space<vmem>>, vector<16x128xbf16>,
    %c48_61 = arith.constant 48 : index
    %c512_62 = arith.constant 512 : index
    %116 = vector.load %arg11[%c48_61, %c512_62] : memref<128x640xbf16, #tpu.memory_space<vmem>>, vector<16x128xbf16>
    tpu.vector_store %arg11[%c48_61, %c512_62], %111 {strides = array<i32>} : memref<128x640xbf16, #tpu.memory_space<vmem>>, vector<16x128xbf16>,
    %117 = vector.extract_strided_slice %3 {offsets = [256, 0], sizes = [16, 256], strides = [1, 1]} : vector<384x256xf32> to vector<16x256xf32>
    %118 = vector.extract_strided_slice %3 {offsets = [272, 0], sizes = [16, 256], strides = [1, 1]} : vector<384x256xf32> to vector<16x256xf32>
    %119 = arith.maximumf %117, %118 : vector<16x256xf32>
    %120 = vector.extract_strided_slice %119 {offsets = [0, 0], sizes = [16, 128], strides = [1, 1]} : vector<16x256xf32> to vector<16x128xf32>
    %121 = vector.extract_strided_slice %119 {offsets = [0, 128], sizes = [16, 128], strides = [1, 1]} : vector<16x256xf32> to vector<16x128xf32>
    %122 = arith.maximumf %120, %121 : vector<16x128xf32>
    %123 = arith.addf %122, %6 : vector<16x128xf32>
    %cst_63 = arith.constant 0.000000e+00 : f32
    %124 = vector.broadcast %cst_63 : f32 to vector<16x128xf32>
    %125 = arith.maximumf %123, %124 : vector<16x128xf32>
    %126 = arith.truncf %125 : vector<16x128xf32> to vector<16x128xbf16>
    %c112_64 = arith.constant 112 : index
    %c128_65 = arith.constant 128 : index
    %127 = vector.load %arg11[%c112_64, %c128_65] : memref<128x640xbf16, #tpu.memory_space<vmem>>, vector<16x128xbf16>
    tpu.vector_store %arg11[%c112_64, %c128_65], %126 {strides = array<i32>} : memref<128x640xbf16, #tpu.memory_space<vmem>>, vector<16x128xbf16>,
    %c96_66 = arith.constant 96 : index
    %c256_67 = arith.constant 256 : index
    %128 = vector.load %arg11[%c96_66, %c256_67] : memref<128x640xbf16, #tpu.memory_space<vmem>>, vector<16x128xbf16>
    tpu.vector_store %arg11[%c96_66, %c256_67], %126 {strides = array<i32>} : memref<128x640xbf16, #tpu.memory_space<vmem>>, vector<16x128xbf16>,
    %c80_68 = arith.constant 80 : index
    %c384_69 = arith.constant 384 : index
    %129 = vector.load %arg11[%c80_68, %c384_69] : memref<128x640xbf16, #tpu.memory_space<vmem>>, vector<16x128xbf16>
    tpu.vector_store %arg11[%c80_68, %c384_69], %126 {strides = array<i32>} : memref<128x640xbf16, #tpu.memory_space<vmem>>, vector<16x128xbf16>,
    %c64_70 = arith.constant 64 : index
    %c512_71 = arith.constant 512 : index
    %130 = vector.load %arg11[%c64_70, %c512_71] : memref<128x640xbf16, #tpu.memory_space<vmem>>, vector<16x128xbf16>
    tpu.vector_store %arg11[%c64_70, %c512_71], %126 {strides = array<i32>} : memref<128x640xbf16, #tpu.memory_space<vmem>>, vector<16x128xbf16>,
    %131 = vector.extract_strided_slice %3 {offsets = [288, 0], sizes = [16, 256], strides = [1, 1]} : vector<384x256xf32> to vector<16x256xf32>
    %132 = vector.extract_strided_slice %3 {offsets = [304, 0], sizes = [16, 256], strides = [1, 1]} : vector<384x256xf32> to vector<16x256xf32>
    %133 = arith.maximumf %131, %132 : vector<16x256xf32>
    %134 = vector.extract_strided_slice %133 {offsets = [0, 0], sizes = [16, 128], strides = [1, 1]} : vector<16x256xf32> to vector<16x128xf32>
    %135 = vector.extract_strided_slice %133 {offsets = [0, 128], sizes = [16, 128], strides = [1, 1]} : vector<16x256xf32> to vector<16x128xf32>
    %136 = arith.maximumf %134, %135 : vector<16x128xf32>
    %137 = arith.addf %136, %6 : vector<16x128xf32>
    %cst_72 = arith.constant 0.000000e+00 : f32
    %138 = vector.broadcast %cst_72 : f32 to vector<16x128xf32>
    %139 = arith.maximumf %137, %138 : vector<16x128xf32>
    %140 = arith.truncf %139 : vector<16x128xf32> to vector<16x128xbf16>
    %c112_73 = arith.constant 112 : index
    %c256_74 = arith.constant 256 : index
    %141 = vector.load %arg11[%c112_73, %c256_74] : memref<128x640xbf16, #tpu.memory_space<vmem>>, vector<16x128xbf16>
    tpu.vector_store %arg11[%c112_73, %c256_74], %140 {strides = array<i32>} : memref<128x640xbf16, #tpu.memory_space<vmem>>, vector<16x128xbf16>,
    %c96_75 = arith.constant 96 : index
    %c384_76 = arith.constant 384 : index
    %142 = vector.load %arg11[%c96_75, %c384_76] : memref<128x640xbf16, #tpu.memory_space<vmem>>, vector<16x128xbf16>
    tpu.vector_store %arg11[%c96_75, %c384_76], %140 {strides = array<i32>} : memref<128x640xbf16, #tpu.memory_space<vmem>>, vector<16x128xbf16>,
    %c80_77 = arith.constant 80 : index
    %c512_78 = arith.constant 512 : index
    %143 = vector.load %arg11[%c80_77, %c512_78] : memref<128x640xbf16, #tpu.memory_space<vmem>>, vector<16x128xbf16>
    tpu.vector_store %arg11[%c80_77, %c512_78], %140 {strides = array<i32>} : memref<128x640xbf16, #tpu.memory_space<vmem>>, vector<16x128xbf16>,
    %144 = vector.extract_strided_slice %3 {offsets = [320, 0], sizes = [16, 256], strides = [1, 1]} : vector<384x256xf32> to vector<16x256xf32>
    %145 = vector.extract_strided_slice %3 {offsets = [336, 0], sizes = [16, 256], strides = [1, 1]} : vector<384x256xf32> to vector<16x256xf32>
    %146 = arith.maximumf %144, %145 : vector<16x256xf32>
    %147 = vector.extract_strided_slice %146 {offsets = [0, 0], sizes = [16, 128], strides = [1, 1]} : vector<16x256xf32> to vector<16x128xf32>
    %148 = vector.extract_strided_slice %146 {offsets = [0, 128], sizes = [16, 128], strides = [1, 1]} : vector<16x256xf32> to vector<16x128xf32>
    %149 = arith.maximumf %147, %148 : vector<16x128xf32>
    %150 = arith.addf %149, %6 : vector<16x128xf32>
    %cst_79 = arith.constant 0.000000e+00 : f32
    %151 = vector.broadcast %cst_79 : f32 to vector<16x128xf32>
    %152 = arith.maximumf %150, %151 : vector<16x128xf32>
    %153 = arith.truncf %152 : vector<16x128xf32> to vector<16x128xbf16>
    %c112_80 = arith.constant 112 : index
    %c384_81 = arith.constant 384 : index
    %154 = vector.load %arg11[%c112_80, %c384_81] : memref<128x640xbf16, #tpu.memory_space<vmem>>, vector<16x128xbf16>
    tpu.vector_store %arg11[%c112_80, %c384_81], %153 {strides = array<i32>} : memref<128x640xbf16, #tpu.memory_space<vmem>>, vector<16x128xbf16>,
    %c96_82 = arith.constant 96 : index
    %c512_83 = arith.constant 512 : index
    %155 = vector.load %arg11[%c96_82, %c512_83] : memref<128x640xbf16, #tpu.memory_space<vmem>>, vector<16x128xbf16>
    tpu.vector_store %arg11[%c96_82, %c512_83], %153 {strides = array<i32>} : memref<128x640xbf16, #tpu.memory_space<vmem>>, vector<16x128xbf16>,
    %156 = vector.extract_strided_slice %3 {offsets = [352, 0], sizes = [16, 256], strides = [1, 1]} : vector<384x256xf32> to vector<16x256xf32>
    %157 = vector.extract_strided_slice %3 {offsets = [368, 0], sizes = [16, 256], strides = [1, 1]} : vector<384x256xf32> to vector<16x256xf32>
    %158 = arith.maximumf %156, %157 : vector<16x256xf32>
    %159 = vector.extract_strided_slice %158 {offsets = [0, 0], sizes = [16, 128], strides = [1, 1]} : vector<16x256xf32> to vector<16x128xf32>
    %160 = vector.extract_strided_slice %158 {offsets = [0, 128], sizes = [16, 128], strides = [1, 1]} : vector<16x256xf32> to vector<16x128xf32>
    %161 = arith.maximumf %159, %160 : vector<16x128xf32>
    %162 = arith.addf %161, %6 : vector<16x128xf32>
    %cst_84 = arith.constant 0.000000e+00 : f32
    %163 = vector.broadcast %cst_84 : f32 to vector<16x128xf32>
    %164 = arith.maximumf %162, %163 : vector<16x128xf32>
    %165 = arith.truncf %164 : vector<16x128xf32> to vector<16x128xbf16>
    %c112_85 = arith.constant 112 : index
    %c512_86 = arith.constant 512 : index
    %166 = vector.load %arg11[%c112_85, %c512_86] : memref<128x640xbf16, #tpu.memory_space<vmem>>, vector<16x128xbf16>
    tpu.vector_store %arg11[%c112_85, %c512_86], %165 {strides = array<i32>} : memref<128x640xbf16, #tpu.memory_space<vmem>>, vector<16x128xbf16>,
    %c0_87 = arith.constant 0 : index
    %c0_88 = arith.constant 0 : index
    %167 = vector.load %arg11[%c0_87, %c0_88] : memref<128x640xbf16, #tpu.memory_space<vmem>>, vector<128x640xbf16>
    %c0_89 = arith.constant 0 : index
    %c0_90 = arith.constant 0 : index
    %168 = vector.load %arg4[%c0_89, %c0_90] : memref<640x256xbf16, #tpu.memory_space<vmem>>, vector<640x256xbf16>
    %cst_91 = arith.constant dense<0.000000e+00> : vector<128x256xf32>
    %169 = tpu.matmul %167, %168, %cst_91 {dimension_numbers = #tpu.dot_dimension_numbers<[1], [0], [0], [1], [0, 0, 1, 1], [], []>} : vector<128x640xbf16>, vector<640x256xbf16>, vector<128x256xf32> -> vector<128x256xf32>
    %c0_92 = arith.constant 0 : index
    %c0_93 = arith.constant 0 : index
    %170 = vector.load %arg5[%c0_92, %c0_93] : memref<1x128xf32, #tpu.memory_space<vmem>>, vector<1x128xf32>
    %171 = vector.shape_cast %170 : vector<1x128xf32> to vector<1x128xf32>
    %172 = vector.broadcast %171 : vector<1x128xf32> to vector<16x128xf32>
    %173 = vector.extract_strided_slice %169 {offsets = [0, 0], sizes = [16, 256], strides = [1, 1]} : vector<128x256xf32> to vector<16x256xf32>
    %174 = vector.extract_strided_slice %169 {offsets = [16, 0], sizes = [16, 256], strides = [1, 1]} : vector<128x256xf32> to vector<16x256xf32>
    %175 = arith.maximumf %173, %174 : vector<16x256xf32>
    %176 = vector.extract_strided_slice %175 {offsets = [0, 0], sizes = [16, 128], strides = [1, 1]} : vector<16x256xf32> to vector<16x128xf32>
    %177 = vector.extract_strided_slice %175 {offsets = [0, 128], sizes = [16, 128], strides = [1, 1]} : vector<16x256xf32> to vector<16x128xf32>
    %178 = arith.maximumf %176, %177 : vector<16x128xf32>
    %179 = arith.addf %178, %172 : vector<16x128xf32>
    %cst_94 = arith.constant 0.000000e+00 : f32
    %180 = vector.broadcast %cst_94 : f32 to vector<16x128xf32>
    %181 = arith.maximumf %179, %180 : vector<16x128xf32>
    %182 = arith.truncf %181 : vector<16x128xf32> to vector<16x128xbf16>
    %183 = vector.extract_strided_slice %169 {offsets = [32, 0], sizes = [16, 256], strides = [1, 1]} : vector<128x256xf32> to vector<16x256xf32>
    %184 = vector.extract_strided_slice %169 {offsets = [48, 0], sizes = [16, 256], strides = [1, 1]} : vector<128x256xf32> to vector<16x256xf32>
    %185 = arith.maximumf %183, %184 : vector<16x256xf32>
    %186 = vector.extract_strided_slice %185 {offsets = [0, 0], sizes = [16, 128], strides = [1, 1]} : vector<16x256xf32> to vector<16x128xf32>
    %187 = vector.extract_strided_slice %185 {offsets = [0, 128], sizes = [16, 128], strides = [1, 1]} : vector<16x256xf32> to vector<16x128xf32>
    %188 = arith.maximumf %186, %187 : vector<16x128xf32>
    %189 = arith.addf %188, %172 : vector<16x128xf32>
    %cst_95 = arith.constant 0.000000e+00 : f32
    %190 = vector.broadcast %cst_95 : f32 to vector<16x128xf32>
    %191 = arith.maximumf %189, %190 : vector<16x128xf32>
    %192 = arith.truncf %191 : vector<16x128xf32> to vector<16x128xbf16>
    %193 = vector.extract_strided_slice %169 {offsets = [64, 0], sizes = [16, 256], strides = [1, 1]} : vector<128x256xf32> to vector<16x256xf32>
    %194 = vector.extract_strided_slice %169 {offsets = [80, 0], sizes = [16, 256], strides = [1, 1]} : vector<128x256xf32> to vector<16x256xf32>
    %195 = arith.maximumf %193, %194 : vector<16x256xf32>
    %196 = vector.extract_strided_slice %195 {offsets = [0, 0], sizes = [16, 128], strides = [1, 1]} : vector<16x256xf32> to vector<16x128xf32>
    %197 = vector.extract_strided_slice %195 {offsets = [0, 128], sizes = [16, 128], strides = [1, 1]} : vector<16x256xf32> to vector<16x128xf32>
    %198 = arith.maximumf %196, %197 : vector<16x128xf32>
    %199 = arith.addf %198, %172 : vector<16x128xf32>
    %cst_96 = arith.constant 0.000000e+00 : f32
    %200 = vector.broadcast %cst_96 : f32 to vector<16x128xf32>
    %201 = arith.maximumf %199, %200 : vector<16x128xf32>
    %202 = arith.truncf %201 : vector<16x128xf32> to vector<16x128xbf16>
    %203 = vector.extract_strided_slice %169 {offsets = [96, 0], sizes = [16, 256], strides = [1, 1]} : vector<128x256xf32> to vector<16x256xf32>
    %204 = vector.extract_strided_slice %169 {offsets = [112, 0], sizes = [16, 256], strides = [1, 1]} : vector<128x256xf32> to vector<16x256xf32>
    %205 = arith.maximumf %203, %204 : vector<16x256xf32>
    %206 = vector.extract_strided_slice %205 {offsets = [0, 0], sizes = [16, 128], strides = [1, 1]} : vector<16x256xf32> to vector<16x128xf32>
    %207 = vector.extract_strided_slice %205 {offsets = [0, 128], sizes = [16, 128], strides = [1, 1]} : vector<16x256xf32> to vector<16x128xf32>
    %208 = arith.maximumf %206, %207 : vector<16x128xf32>
    %209 = arith.addf %208, %172 : vector<16x128xf32>
    %cst_97 = arith.constant 0.000000e+00 : f32
    %210 = vector.broadcast %cst_97 : f32 to vector<16x128xf32>
    %211 = arith.maximumf %209, %210 : vector<16x128xf32>
    %212 = arith.truncf %211 : vector<16x128xf32> to vector<16x128xbf16>
    %213 = tpu.concatenate %182, %192, %202, %212 in 1 : vector<16x128xbf16>, vector<16x128xbf16>, vector<16x128xbf16>, vector<16x128xbf16> -> vector<16x512xbf16>
    %c0_98 = arith.constant 0 : index
    %c0_99 = arith.constant 0 : index
    %214 = vector.load %arg6[%c0_98, %c0_99] : memref<512x128xbf16, #tpu.memory_space<vmem>>, vector<512x128xbf16>
    %cst_100 = arith.constant dense<0.000000e+00> : vector<16x128xf32>
    %215 = tpu.matmul %213, %214, %cst_100 {dimension_numbers = #tpu.dot_dimension_numbers<[1], [0], [0], [1], [0, 0, 1, 1], [], []>} : vector<16x512xbf16>, vector<512x128xbf16>, vector<16x128xf32> -> vector<16x128xf32>
    %c0_101 = arith.constant 0 : index
    %c0_102 = arith.constant 0 : index
    %216 = vector.load %arg7[%c0_101, %c0_102] : memref<1x128xf32, #tpu.memory_space<vmem>>, vector<1x128xf32>
    %217 = vector.broadcast %216 : vector<1x128xf32> to vector<16x128xf32>
    %218 = arith.addf %215, %217 : vector<16x128xf32>
    %cst_103 = arith.constant 0.000000e+00 : f32
    %219 = vector.broadcast %cst_103 : f32 to vector<16x128xf32>
    %220 = arith.maximumf %218, %219 : vector<16x128xf32>
    %221 = arith.truncf %220 : vector<16x128xf32> to vector<16x128xbf16>
    %c0_104 = arith.constant 0 : index
    %c0_105 = arith.constant 0 : index
    %222 = vector.load %arg8[%c0_104, %c0_105] : memref<128x128xbf16, #tpu.memory_space<vmem>>, vector<128x128xbf16>
    %cst_106 = arith.constant dense<0.000000e+00> : vector<16x128xf32>
    %223 = tpu.matmul %221, %222, %cst_106 {dimension_numbers = #tpu.dot_dimension_numbers<[1], [0], [0], [1], [0, 0, 1, 1], [], []>} : vector<16x128xbf16>, vector<128x128xbf16>, vector<16x128xf32> -> vector<16x128xf32>
    %c0_107 = arith.constant 0 : index
    %c0_108 = arith.constant 0 : index
    %224 = vector.load %arg9[%c0_107, %c0_108] : memref<1x128xf32, #tpu.memory_space<vmem>>, vector<1x128xf32>
    %225 = vector.broadcast %224 : vector<1x128xf32> to vector<16x128xf32>
    %226 = arith.addf %223, %225 : vector<16x128xf32>
    %cst_109 = arith.constant dense<0xFF800000> : vector<16xf32>
    %227 = vector.multi_reduction <maximumf>, %226, %cst_109 [1] : vector<16x128xf32> to vector<16xf32>
    %228 = vector.shape_cast %227 : vector<16xf32> to vector<16x1xf32>
    %229 = vector.broadcast %228 : vector<16x1xf32> to vector<16x128xf32>
    %230 = arith.subf %226, %229 : vector<16x128xf32>
    %231 = math.exp %230 : vector<16x128xf32>
    %cst_110 = arith.constant dense<0.000000e+00> : vector<16xf32>
    %232 = vector.multi_reduction <add>, %231, %cst_110 [1] : vector<16x128xf32> to vector<16xf32>
    %233 = vector.shape_cast %232 : vector<16xf32> to vector<16x1xf32>
    %234 = math.log %233 : vector<16x1xf32>
    %235 = vector.broadcast %234 : vector<16x1xf32> to vector<16x128xf32>
    %236 = arith.subf %230, %235 : vector<16x128xf32>
    %c0_111 = arith.constant 0 : index
    %c0_112 = arith.constant 0 : index
    %237 = vector.load %arg10[%c0_111, %c0_112] : memref<16x128xf32, #tpu.memory_space<vmem>>, vector<16x128xf32>
    tpu.vector_store %arg10[%c0_111, %c0_112], %236 {strides = array<i32>} : memref<16x128xf32, #tpu.memory_space<vmem>>, vector<16x128xf32>,
    return
  }
  func.func @transform_0(%arg0: i32) -> (i32, i32, i32) {
    %c0_i32 = arith.constant 0 : i32
    %c0_i32_0 = arith.constant 0 : i32
    %c0_i32_1 = arith.constant 0 : i32
    return %c0_i32, %arg0, %c0_i32_0 : i32, i32, i32
  }
  func.func @transform_1(%arg0: i32) -> (i32, i32) {
    %c0_i32 = arith.constant 0 : i32
    %c0_i32_0 = arith.constant 0 : i32
    %c0_i32_1 = arith.constant 0 : i32
    return %c0_i32, %c0_i32_0 : i32, i32
  }
  func.func @transform_2(%arg0: i32) -> (i32, i32) {
    %c0_i32 = arith.constant 0 : i32
    %c0_i32_0 = arith.constant 0 : i32
    %c0_i32_1 = arith.constant 0 : i32
    return %c0_i32, %c0_i32_0 : i32, i32
  }
  func.func @transform_3(%arg0: i32) -> (i32, i32) {
    %c0_i32 = arith.constant 0 : i32
    %c0_i32_0 = arith.constant 0 : i32
    %c0_i32_1 = arith.constant 0 : i32
    return %c0_i32, %c0_i32_0 : i32, i32
  }
  func.func @transform_4(%arg0: i32) -> (i32, i32) {
    %c0_i32 = arith.constant 0 : i32
    %c0_i32_0 = arith.constant 0 : i32
    %c0_i32_1 = arith.constant 0 : i32
    return %c0_i32, %c0_i32_0 : i32, i32
  }
  func.func @transform_5(%arg0: i32) -> (i32, i32) {
    %c0_i32 = arith.constant 0 : i32
    %c0_i32_0 = arith.constant 0 : i32
    %c0_i32_1 = arith.constant 0 : i32
    return %c0_i32, %c0_i32_0 : i32, i32
  }
  func.func @transform_6(%arg0: i32) -> (i32, i32) {
    %c0_i32 = arith.constant 0 : i32
    %c0_i32_0 = arith.constant 0 : i32
    %c0_i32_1 = arith.constant 0 : i32
    return %c0_i32, %c0_i32_0 : i32, i32
  }
  func.func @transform_7(%arg0: i32) -> (i32, i32) {
    %c0_i32 = arith.constant 0 : i32
    %c0_i32_0 = arith.constant 0 : i32
    %c0_i32_1 = arith.constant 0 : i32
    return %c0_i32, %c0_i32_0 : i32, i32
  }
  func.func @transform_8(%arg0: i32) -> (i32, i32) {
    %c0_i32 = arith.constant 0 : i32
    %c0_i32_0 = arith.constant 0 : i32
    %c0_i32_1 = arith.constant 0 : i32
    return %c0_i32, %c0_i32_0 : i32, i32
  }
  func.func @transform_9(%arg0: i32) -> (i32, i32) {
    %c0_i32 = arith.constant 0 : i32
    %c0_i32_0 = arith.constant 0 : i32
    return %arg0, %c0_i32 : i32, i32
  }
}

</mosaic_0001>

<llo_original>
// kernel: net_forward.1
$region0: #{net_forward.1}
  #allocation0 [shape = 'u32[]', space=smem, size = 0x4, offset = 0x4, fixed_abs, tag = 'smem constant byte address 0x4 - core index']
  #allocation1 [shape = 'u32[144,128]{1,0:T(1,128)}', space=vmem, size = 0x12000, scoped, tag = 'internal scratch']
  #allocation2 [shape = 'bf16[128,640]{1,0:T(8,128)(2,1)}', space=vmem, size = 0x28000, scoped, tag = 'scratch operand']
  %s0 = inlined_call_operand.vmem [shape: bf16[24,16,140], index: 0, kind: input, shape index: {}]
  %s1 = inlined_call_operand.vmem [shape: bf16[140,256], index: 1, kind: input, shape index: {}]
  %s2 = inlined_call_operand.vmem [shape: f32[1,128], index: 2, kind: input, shape index: {}]
  %s3 = inlined_call_operand.vmem [shape: bf16[640,256], index: 3, kind: input, shape index: {}]
  %s4 = inlined_call_operand.vmem [shape: f32[1,128], index: 4, kind: input, shape index: {}]
  %s5 = inlined_call_operand.vmem [shape: bf16[512,128], index: 5, kind: input, shape index: {}]
  %s6 = inlined_call_operand.vmem [shape: f32[1,128], index: 6, kind: input, shape index: {}]
  %s7 = inlined_call_operand.vmem [shape: bf16[128,128], index: 7, kind: input, shape index: {}]
  %s8 = inlined_call_operand.vmem [shape: f32[1,128], index: 8, kind: input, shape index: {}]
  %s9 = inlined_call_operand.vmem [shape: f32[16,128], index: 9, kind: output, shape index: {}]
  %s10 = sld [smem:[#allocation0]]
  $region46: #{net_forward.1} parent=0
    _
  %s12 = ssub.s32 1, %s10
  %s13 = scalar_select 0, %s12, %s10
  // Predicated region
  $region2: #{net_forward.1} parent=0 // pred_check
    _
  $region3: #{net_forward.1} parent=0 // pred_check_branch
    %15 = sbr.rel (0) target = $region5
  $region4: #{net_forward.1} parent=0 // pred_region
    _
  $region5: #{net_forward.1} parent=0 // pred_fallthru
    _
  // Predicated region
  $region6: #{net_forward.1} parent=0 // pred_check
    _
  $region7: #{net_forward.1} parent=0 // pred_check_branch
    %17 = sbr.rel (0) target = $region9
  $region8: #{net_forward.1} parent=0 // pred_region
    _
  $region9: #{net_forward.1} parent=0 // pred_fallthru
    _
  // Predicated region
  $region10: #{net_forward.1} parent=0 // pred_check
    _
  $region11: #{net_forward.1} parent=0 // pred_check_branch
    %19 = sbr.rel (0) target = $region13
  $region12: #{net_forward.1} parent=0 // pred_region
    _
  $region13: #{net_forward.1} parent=0 // pred_fallthru
    _
  // Predicated region
  $region14: #{net_forward.1} parent=0 // pred_check
    _
  $region15: #{net_forward.1} parent=0 // pred_check_branch
    %21 = sbr.rel (0) target = $region17
  $region16: #{net_forward.1} parent=0 // pred_region
    _
  $region17: #{net_forward.1} parent=0 // pred_fallthru
    _
  // Predicated region
  $region18: #{net_forward.1} parent=0 // pred_check
    _
  $region19: #{net_forward.1} parent=0 // pred_check_branch
    %23 = sbr.rel (0) target = $region21
  $region20: #{net_forward.1} parent=0 // pred_region
    _
  $region21: #{net_forward.1} parent=0 // pred_fallthru
    _
  // Predicated region
  $region22: #{net_forward.1} parent=0 // pred_check
    _
  $region23: #{net_forward.1} parent=0 // pred_check_branch
    %25 = sbr.rel (0) target = $region25
  $region24: #{net_forward.1} parent=0 // pred_region
    _
  $region25: #{net_forward.1} parent=0 // pred_fallthru
    _
  // Predicated region
  $region26: #{net_forward.1} parent=0 // pred_check
    _
  $region27: #{net_forward.1} parent=0 // pred_check_branch
    %27 = sbr.rel (0) target = $region29
  $region28: #{net_forward.1} parent=0 // pred_region
    _
  $region29: #{net_forward.1} parent=0 // pred_fallthru
    _
  // Predicated region
  $region30: #{net_forward.1} parent=0 // pred_check
    _
  $region31: #{net_forward.1} parent=0 // pred_check_branch
    %29 = sbr.rel (0) target = $region33
  $region32: #{net_forward.1} parent=0 // pred_region
    _
  $region33: #{net_forward.1} parent=0 // pred_fallthru
    _
  // Predicated region
  $region34: #{net_forward.1} parent=0 // pred_check
    _
  $region35: #{net_forward.1} parent=0 // pred_check_branch
    %31 = sbr.rel (0) target = $region37
  $region36: #{net_forward.1} parent=0 // pred_region
    _
  $region37: #{net_forward.1} parent=0 // pred_fallthru
    _
  %v33 = vld [vmem:[%s0] sm:$0xff]
  %v34 = vld [vmem:[%s0 + $0x8] sm:$0xff]
  %v35 = vld [vmem:[%s0 + $0x10] sm:$0xff]
  %v36 = vld [vmem:[%s0 + $0x18] sm:$0xff]
  %v37 = vld [vmem:[%s0 + $0x20] sm:$0xff]
  %v38 = vld [vmem:[%s0 + $0x28] sm:$0xff]
  %v39 = vld [vmem:[%s0 + $0x30] sm:$0xff]
  %v40 = vld [vmem:[%s0 + $0x38] sm:$0xff]
  %v41 = vld [vmem:[%s0 + $0x40] sm:$0xff]
  %v42 = vld [vmem:[%s0 + $0x48] sm:$0xff]
  %v43 = vld [vmem:[%s0 + $0x50] sm:$0xff]
  %v44 = vld [vmem:[%s0 + $0x58] sm:$0xff]
  %v45 = vld [vmem:[%s0 + $0x60] sm:$0xff]
  %v46 = vld [vmem:[%s0 + $0x68] sm:$0xff]
  %v47 = vld [vmem:[%s0 + $0x70] sm:$0xff]
  %v48 = vld [vmem:[%s0 + $0x78] sm:$0xff]
  %v49 = vld [vmem:[%s0 + $0x80] sm:$0xff]
  %v50 = vld [vmem:[%s0 + $0x88] sm:$0xff]
  %v51 = vld [vmem:[%s0 + $0x90] sm:$0xff]
  %v52 = vld [vmem:[%s0 + $0x98] sm:$0xff]
  %v53 = vld [vmem:[%s0 + $0xa0] sm:$0xff]
  %v54 = vld [vmem:[%s0 + $0xa8] sm:$0xff]
  %v55 = vld [vmem:[%s0 + $0xb0] sm:$0xff]
  %v56 = vld [vmem:[%s0 + $0xb8] sm:$0xff]
  %v57 = vld [vmem:[%s0 + $0xc0] sm:$0xff]
  %v58 = vld [vmem:[%s0 + $0xc8] sm:$0xff]
  %v59 = vld [vmem:[%s0 + $0xd0] sm:$0xff]
  %v60 = vld [vmem:[%s0 + $0xd8] sm:$0xff]
  %v61 = vld [vmem:[%s0 + $0xe0] sm:$0xff]
  %v62 = vld [vmem:[%s0 + $0xe8] sm:$0xff]
  %v63 = vld [vmem:[%s0 + $0xf0] sm:$0xff]
  %v64 = vld [vmem:[%s0 + $0xf8] sm:$0xff]
  %v65 = vld [vmem:[%s0 + $0x100] sm:$0xff]
  %v66 = vld [vmem:[%s0 + $0x108] sm:$0xff]
  %v67 = vld [vmem:[%s0 + $0x110] sm:$0xff]
  %v68 = vld [vmem:[%s0 + $0x118] sm:$0xff]
  %v69 = vld [vmem:[%s0 + $0x120] sm:$0xff]
  %v70 = vld [vmem:[%s0 + $0x128] sm:$0xff]
  %v71 = vld [vmem:[%s0 + $0x130] sm:$0xff]
  %v72 = vld [vmem:[%s0 + $0x138] sm:$0xff]
  %v73 = vld [vmem:[%s0 + $0x140] sm:$0xff]
  %v74 = vld [vmem:[%s0 + $0x148] sm:$0xff]
  %v75 = vld [vmem:[%s0 + $0x150] sm:$0xff]
  %v76 = vld [vmem:[%s0 + $0x158] sm:$0xff]
  %v77 = vld [vmem:[%s0 + $0x160] sm:$0xff]
  %v78 = vld [vmem:[%s0 + $0x168] sm:$0xff]
  %v79 = vld [vmem:[%s0 + $0x170] sm:$0xff]
  %v80 = vld [vmem:[%s0 + $0x178] sm:$0xff]
  %v81 = vld [vmem:[%s1] sm:$0xff]
  %v82 = vld [vmem:[%s1 + $0x8] sm:$0xff]
  %v83 = vld [vmem:[%s1 + $0x10] sm:$0xff]
  %v84 = vld [vmem:[%s1 + $0x18] sm:$0xff]
  %v85 = vld [vmem:[%s1 + $0x20] sm:$0xff]
  %v86 = vld [vmem:[%s1 + $0x28] sm:$0xff]
  %v87 = vld [vmem:[%s1 + $0x30] sm:$0xff]
  %v88 = vld [vmem:[%s1 + $0x38] sm:$0xff]
  %v89 = vld [vmem:[%s1 + $0x40] sm:$0xff]
  %v90 = vld [vmem:[%s1 + $0x48] sm:$0xff]
  %v91 = vld [vmem:[%s1 + $0x50] sm:$0xff]
  %v92 = vld [vmem:[%s1 + $0x58] sm:$0xff]
  %v93 = vld [vmem:[%s1 + $0x60] sm:$0xff]
  %v94 = vld [vmem:[%s1 + $0x68] sm:$0xff]
  %v95 = vld [vmem:[%s1 + $0x70] sm:$0xff]
  %v96 = vld [vmem:[%s1 + $0x78] sm:$0xff]
  %v97 = vld [vmem:[%s1 + $0x80] sm:$0xff]
  %v98 = vld [vmem:[%s1 + $0x88] sm:$0x33]
  %v147 = vunpack.c.l.b16 %v33
  %v148 = vunpack.c.h.b16 %v33
  %v149 = vunpack.c.l.b16 %v34
  %v150 = vunpack.c.h.b16 %v34
  %v151 = vunpack.c.l.b16 %v35
  %v152 = vunpack.c.h.b16 %v35
  %v153 = vunpack.c.l.b16 %v36
  %v154 = vunpack.c.h.b16 %v36
  %v155 = vunpack.c.l.b16 %v37
  %v156 = vunpack.c.h.b16 %v37
  %v157 = vunpack.c.l.b16 %v38
  %v158 = vunpack.c.h.b16 %v38
  %v159 = vunpack.c.l.b16 %v39
  %v160 = vunpack.c.h.b16 %v39
  %v161 = vunpack.c.l.b16 %v40
  %v162 = vunpack.c.h.b16 %v40
  %v163 = vunpack.c.l.b16 %v41
  %v164 = vunpack.c.h.b16 %v41
  %v165 = vunpack.c.l.b16 %v42
  %v166 = vunpack.c.h.b16 %v42
  %v167 = vunpack.c.l.b16 %v43
  %v168 = vunpack.c.h.b16 %v43
  %v169 = vunpack.c.l.b16 %v44
  %v170 = vunpack.c.h.b16 %v44
  %v171 = vunpack.c.l.b16 %v45
  %v172 = vunpack.c.h.b16 %v45
  %v173 = vunpack.c.l.b16 %v46
  %v174 = vunpack.c.h.b16 %v46
  %v175 = vunpack.c.l.b16 %v47
  %v176 = vunpack.c.h.b16 %v47
  %v177 = vunpack.c.l.b16 %v48
  %v178 = vunpack.c.h.b16 %v48
  %v179 = vunpack.c.l.b16 %v49
  %v180 = vunpack.c.h.b16 %v49
  %v181 = vunpack.c.l.b16 %v50
  %v182 = vunpack.c.h.b16 %v50
  %v183 = vunpack.c.l.b16 %v51
  %v184 = vunpack.c.h.b16 %v51
  %v185 = vunpack.c.l.b16 %v52
  %v186 = vunpack.c.h.b16 %v52
  %v187 = vunpack.c.l.b16 %v53
  %v188 = vunpack.c.h.b16 %v53
  %v189 = vunpack.c.l.b16 %v54
  %v190 = vunpack.c.h.b16 %v54
  %v191 = vunpack.c.l.b16 %v55
  %v192 = vunpack.c.h.b16 %v55
  %v193 = vunpack.c.l.b16 %v56
  %v194 = vunpack.c.h.b16 %v56
  %v195 = vunpack.c.l.b16 %v57
  %v196 = vunpack.c.h.b16 %v57
  %v197 = vunpack.c.l.b16 %v58
  %v198 = vunpack.c.h.b16 %v58
  %v199 = vunpack.c.l.b16 %v59
  %v200 = vunpack.c.h.b16 %v59
  %v201 = vunpack.c.l.b16 %v60
  %v202 = vunpack.c.h.b16 %v60
  %v203 = vunpack.c.l.b16 %v61
  %v204 = vunpack.c.h.b16 %v61
  %v205 = vunpack.c.l.b16 %v62
  %v206 = vunpack.c.h.b16 %v62
  %v207 = vunpack.c.l.b16 %v63
  %v208 = vunpack.c.h.b16 %v63
  %v209 = vunpack.c.l.b16 %v64
  %v210 = vunpack.c.h.b16 %v64
  %v211 = vunpack.c.l.b16 %v65
  %v212 = vunpack.c.h.b16 %v65
  %v213 = vunpack.c.l.b16 %v66
  %v214 = vunpack.c.h.b16 %v66
  %v215 = vunpack.c.l.b16 %v67
  %v216 = vunpack.c.h.b16 %v67
  %v217 = vunpack.c.l.b16 %v68
  %v218 = vunpack.c.h.b16 %v68
  %v219 = vunpack.c.l.b16 %v69
  %v220 = vunpack.c.h.b16 %v69
  %v221 = vunpack.c.l.b16 %v70
  %v222 = vunpack.c.h.b16 %v70
  %v223 = vunpack.c.l.b16 %v71
  %v224 = vunpack.c.h.b16 %v71
  %v225 = vunpack.c.l.b16 %v72
  %v226 = vunpack.c.h.b16 %v72
  %v227 = vunpack.c.l.b16 %v73
  %v228 = vunpack.c.h.b16 %v73
  %v229 = vunpack.c.l.b16 %v74
  %v230 = vunpack.c.h.b16 %v74
  %v231 = vunpack.c.l.b16 %v75
  %v232 = vunpack.c.h.b16 %v75
  %v233 = vunpack.c.l.b16 %v76
  %v234 = vunpack.c.h.b16 %v76
  %v235 = vunpack.c.l.b16 %v77
  %v236 = vunpack.c.h.b16 %v77
  %v237 = vunpack.c.l.b16 %v78
  %v238 = vunpack.c.h.b16 %v78
  %v239 = vunpack.c.l.b16 %v79
  %v240 = vunpack.c.h.b16 %v79
  %v241 = vunpack.c.l.b16 %v80
  %v242 = vunpack.c.h.b16 %v80
  %v243 = vpack.c.b16 %v149, %v147
  %v244 = vpack.c.b16 %v150, %v148
  %v245 = vpack.c.b16 %v153, %v151
  %v246 = vpack.c.b16 %v154, %v152
  %v247 = vpack.c.b16 %v157, %v155
  %v248 = vpack.c.b16 %v158, %v156
  %v249 = vpack.c.b16 %v161, %v159
  %v250 = vpack.c.b16 %v162, %v160
  %v251 = vpack.c.b16 %v165, %v163
  %v252 = vpack.c.b16 %v166, %v164
  %v253 = vpack.c.b16 %v169, %v167
  %v254 = vpack.c.b16 %v170, %v168
  %v255 = vpack.c.b16 %v173, %v171
  %v256 = vpack.c.b16 %v174, %v172
  %v257 = vpack.c.b16 %v177, %v175
  %v258 = vpack.c.b16 %v178, %v176
  %v259 = vpack.c.b16 %v181, %v179
  %v260 = vpack.c.b16 %v182, %v180
  %v261 = vpack.c.b16 %v185, %v183
  %v262 = vpack.c.b16 %v186, %v184
  %v263 = vpack.c.b16 %v189, %v187
  %v264 = vpack.c.b16 %v190, %v188
  %v265 = vpack.c.b16 %v193, %v191
  %v266 = vpack.c.b16 %v194, %v192
  %v267 = vpack.c.b16 %v197, %v195
  %v268 = vpack.c.b16 %v198, %v196
  %v269 = vpack.c.b16 %v201, %v199
  %v270 = vpack.c.b16 %v202, %v200
  %v271 = vpack.c.b16 %v205, %v203
  %v272 = vpack.c.b16 %v206, %v204
  %v273 = vpack.c.b16 %v209, %v207
  %v274 = vpack.c.b16 %v210, %v208
  %v275 = vpack.c.b16 %v213, %v211
  %v276 = vpack.c.b16 %v214, %v212
  %v277 = vpack.c.b16 %v217, %v215
  %v278 = vpack.c.b16 %v218, %v216
  %v279 = vpack.c.b16 %v221, %v219
  %v280 = vpack.c.b16 %v222, %v220
  %v281 = vpack.c.b16 %v225, %v223
  %v282 = vpack.c.b16 %v226, %v224
  %v283 = vpack.c.b16 %v229, %v227
  %v284 = vpack.c.b16 %v230, %v228
  %v285 = vpack.c.b16 %v233, %v231
  %v286 = vpack.c.b16 %v234, %v232
  %v287 = vpack.c.b16 %v237, %v235
  %v288 = vpack.c.b16 %v238, %v236
  %v289 = vpack.c.b16 %v241, %v239
  %v290 = vpack.c.b16 %v242, %v240
  %v333 = vunpack.c.l.b16 %v81
  %v334 = vunpack.c.h.b16 %v81
  %v335 = vunpack.c.l.b16 %v82
  %v336 = vunpack.c.h.b16 %v82
  %v337 = vunpack.c.l.b16 %v83
  %v338 = vunpack.c.h.b16 %v83
  %v339 = vunpack.c.l.b16 %v84
  %v340 = vunpack.c.h.b16 %v84
  %v341 = vunpack.c.l.b16 %v85
  %v342 = vunpack.c.h.b16 %v85
  %v343 = vunpack.c.l.b16 %v86
  %v344 = vunpack.c.h.b16 %v86
  %v345 = vunpack.c.l.b16 %v87
  %v346 = vunpack.c.h.b16 %v87
  %v347 = vunpack.c.l.b16 %v88
  %v348 = vunpack.c.h.b16 %v88
  %v349 = vunpack.c.l.b16 %v89
  %v350 = vunpack.c.h.b16 %v89
  %v351 = vunpack.c.l.b16 %v90
  %v352 = vunpack.c.h.b16 %v90
  %v353 = vunpack.c.l.b16 %v91
  %v354 = vunpack.c.h.b16 %v91
  %v355 = vunpack.c.l.b16 %v92
  %v356 = vunpack.c.h.b16 %v92
  %v357 = vunpack.c.l.b16 %v93
  %v358 = vunpack.c.h.b16 %v93
  %v359 = vunpack.c.l.b16 %v94
  %v360 = vunpack.c.h.b16 %v94
  %v361 = vunpack.c.l.b16 %v95
  %v362 = vunpack.c.h.b16 %v95
  %v363 = vunpack.c.l.b16 %v96
  %v364 = vunpack.c.h.b16 %v96
  %v365 = vunpack.c.l.b16 %v97
  %v366 = vunpack.c.h.b16 %v97
  %v367 = vunpack.c.l.b16 %v98
  %v368 = vunpack.c.h.b16 %v98
  %v369 = vpack.c.b16 %v335, %v333
  %v370 = vpack.c.b16 %v336, %v334
  %v371 = vpack.c.b16 %v339, %v337
  %v372 = vpack.c.b16 %v340, %v338
  %v373 = vpack.c.b16 %v343, %v341
  %v374 = vpack.c.b16 %v344, %v342
  %v375 = vpack.c.b16 %v347, %v345
  %v376 = vpack.c.b16 %v348, %v346
  %v377 = vpack.c.b16 %v351, %v349
  %v378 = vpack.c.b16 %v352, %v350
  %v379 = vpack.c.b16 %v355, %v353
  %v380 = vpack.c.b16 %v356, %v354
  %v381 = vpack.c.b16 %v359, %v357
  %v382 = vpack.c.b16 %v360, %v358
  %v383 = vpack.c.b16 %v363, %v361
  %v384 = vpack.c.b16 %v364, %v362
  %v385 = vpack.c.b16 %v367, %v365
  %v386 = vpack.c.b16 %v368, %v366
  %vm403 = vcmask 97280
  %v405 = vsel %vm403, %v244, 0
  %v408 = vsel %vm403, %v246, 0
  %v411 = vsel %vm403, %v248, 0
  %v414 = vsel %vm403, %v250, 0
  %v417 = vsel %vm403, %v252, 0
  %v420 = vsel %vm403, %v254, 0
  %v423 = vsel %vm403, %v256, 0
  %v426 = vsel %vm403, %v258, 0
  %v429 = vsel %vm403, %v260, 0
  %v432 = vsel %vm403, %v262, 0
  %v435 = vsel %vm403, %v264, 0
  %v438 = vsel %vm403, %v266, 0
  %v441 = vsel %vm403, %v268, 0
  %v444 = vsel %vm403, %v270, 0
  %v447 = vsel %vm403, %v272, 0
  %v450 = vsel %vm403, %v274, 0
  %v453 = vsel %vm403, %v276, 0
  %v456 = vsel %vm403, %v278, 0
  %v459 = vsel %vm403, %v280, 0
  %v462 = vsel %vm403, %v282, 0
  %v465 = vsel %vm403, %v284, 0
  %v468 = vsel %vm403, %v286, 0
  %v471 = vsel %vm403, %v288, 0
  %v474 = vsel %vm403, %v290, 0
  %vm476 = vcmask 1045504
  %v478 = vsel %vm476, %v385, 0
  %v481 = vsel %vm476, %v386, 0
  %483 = vmatprep.subr.bf16.mxu0 %v384
  %484 = vmatpush1.bf16.msra.mxu0 %v383
  %485 = vmatprep.subr.bf16.mxu0 %v382
  %486 = vmatpush1.bf16.msra.mxu0 %v381
  %487 = vmatprep.subr.bf16.mxu0 %v380
  %488 = vmatpush1.bf16.msra.mxu0 %v379
  %489 = vmatprep.subr.bf16.mxu0 %v378
  %490 = vmatpush1.bf16.msra.mxu0 %v377
  %491 = vmatprep.subr.bf16.mxu0 %v376
  %492 = vmatpush1.bf16.msra.mxu0 %v375
  %493 = vmatprep.subr.bf16.mxu0 %v374
  %494 = vmatpush1.bf16.msra.mxu0 %v373
  %495 = vmatprep.subr.bf16.mxu0 %v372
  %496 = vmatpush1.bf16.msra.mxu0 %v371
  %497 = vmatprep.subr.bf16.mxu0 %v370
  %498 = vmatpush1.bf16.msra.mxu0 %v369
  %499 = vmatprep.subr.bf16.mxu0 0
  %500 = vmatpush2.bf16.msra.mxu0 0
  %501 = vmatprep.subr.bf16.mxu0 0
  %502 = vmatpush2.bf16.msra.mxu0 0
  %503 = vmatprep.subr.bf16.mxu0 0
  %504 = vmatpush2.bf16.msra.mxu0 0
  %505 = vmatprep.subr.bf16.mxu0 0
  %506 = vmatpush2.bf16.msra.mxu0 0
  %507 = vmatprep.subr.bf16.mxu0 0
  %508 = vmatpush2.bf16.msra.mxu0 0
  %509 = vmatprep.subr.bf16.mxu0 0
  %510 = vmatpush2.bf16.msra.mxu0 0
  %511 = vmatprep.subr.bf16.mxu0 0
  %512 = vmatpush2.bf16.msra.mxu0 0
  %513 = vmatprep.subr.bf16.mxu0 %v481
  %514 = vmatpush2.bf16.msra.mxu0 %v478
  %515 = vmatprep.mubr.bf16.mxu0 %v405
  %516 = vmatmul.mubr.bf16.gmra.mxu0 %v243
  %v517 = vpop.f32.mrf.mxu0
  %v518 = vadd.f32 0.0, %v517
  %v519 = vpop.f32.mrf.mxu0
  %v520 = vadd.f32 0.0, %v519
  %v521 = vpop.f32.mrf.mxu0
  %v522 = vadd.f32 0.0, %v521
  %v523 = vpop.f32.mrf.mxu0
  %v524 = vadd.f32 0.0, %v523
  %525 = vmatprep.mubr.bf16.mxu0 %v408
  %526 = vmatmul.mubr.bf16.gmra.mxu0 %v245
  %v527 = vpop.f32.mrf.mxu0
  %v528 = vadd.f32 0.0, %v527
  %v529 = vpop.f32.mrf.mxu0
  %v530 = vadd.f32 0.0, %v529
  %v531 = vpop.f32.mrf.mxu0
  %v532 = vadd.f32 0.0, %v531
  %v533 = vpop.f32.mrf.mxu0
  %v534 = vadd.f32 0.0, %v533
  %535 = vmatprep.mubr.bf16.mxu0 %v411
  %536 = vmatmul.mubr.bf16.gmra.mxu0 %v247
  %v537 = vpop.f32.mrf.mxu0
  %v538 = vadd.f32 0.0, %v537
  %v539 = vpop.f32.mrf.mxu0
  %v540 = vadd.f32 0.0, %v539
  %v541 = vpop.f32.mrf.mxu0
  %v542 = vadd.f32 0.0, %v541
  %v543 = vpop.f32.mrf.mxu0
  %v544 = vadd.f32 0.0, %v543
  %545 = vmatprep.mubr.bf16.mxu0 %v414
  %546 = vmatmul.mubr.bf16.gmra.mxu0 %v249
  %v547 = vpop.f32.mrf.mxu0
  %v548 = vadd.f32 0.0, %v547
  %v549 = vpop.f32.mrf.mxu0
  %v550 = vadd.f32 0.0, %v549
  %v551 = vpop.f32.mrf.mxu0
  %v552 = vadd.f32 0.0, %v551
  %v553 = vpop.f32.mrf.mxu0
  %v554 = vadd.f32 0.0, %v553
  %555 = vmatprep.mubr.bf16.mxu0 %v417
  %556 = vmatmul.mubr.bf16.gmra.mxu0 %v251
  %v557 = vpop.f32.mrf.mxu0
  %v558 = vadd.f32 0.0, %v557
  %v559 = vpop.f32.mrf.mxu0
  %v560 = vadd.f32 0.0, %v559
  %v561 = vpop.f32.mrf.mxu0
  %v562 = vadd.f32 0.0, %v561
  %v563 = vpop.f32.mrf.mxu0
  %v564 = vadd.f32 0.0, %v563
  %565 = vmatprep.mubr.bf16.mxu0 %v420
  %566 = vmatmul.mubr.bf16.gmra.mxu0 %v253
  %v567 = vpop.f32.mrf.mxu0
  %v568 = vadd.f32 0.0, %v567
  %v569 = vpop.f32.mrf.mxu0
  %v570 = vadd.f32 0.0, %v569
  %v571 = vpop.f32.mrf.mxu0
  %v572 = vadd.f32 0.0, %v571
  %v573 = vpop.f32.mrf.mxu0
  %v574 = vadd.f32 0.0, %v573
  %575 = vmatprep.mubr.bf16.mxu0 %v423
  %576 = vmatmul.mubr.bf16.gmra.mxu0 %v255
  %v577 = vpop.f32.mrf.mxu0
  %v578 = vadd.f32 0.0, %v577
  %v579 = vpop.f32.mrf.mxu0
  %v580 = vadd.f32 0.0, %v579
  %v581 = vpop.f32.mrf.mxu0
  %v582 = vadd.f32 0.0, %v581
  %v583 = vpop.f32.mrf.mxu0
  %v584 = vadd.f32 0.0, %v583
  %585 = vmatprep.mubr.bf16.mxu0 %v426
  %586 = vmatmul.mubr.bf16.gmra.mxu0 %v257
  %v587 = vpop.f32.mrf.mxu0
  %v588 = vadd.f32 0.0, %v587
  %v589 = vpop.f32.mrf.mxu0
  %v590 = vadd.f32 0.0, %v589
  %v591 = vpop.f32.mrf.mxu0
  %v592 = vadd.f32 0.0, %v591
  %v593 = vpop.f32.mrf.mxu0
  %v594 = vadd.f32 0.0, %v593
  %595 = vmatprep.mubr.bf16.mxu0 %v429
  %596 = vmatmul.mubr.bf16.gmra.mxu0 %v259
  %v597 = vpop.f32.mrf.mxu0
  %v598 = vadd.f32 0.0, %v597
  %v599 = vpop.f32.mrf.mxu0
  %v600 = vadd.f32 0.0, %v599
  %v601 = vpop.f32.mrf.mxu0
  %v602 = vadd.f32 0.0, %v601
  %v603 = vpop.f32.mrf.mxu0
  %v604 = vadd.f32 0.0, %v603
  %605 = vmatprep.mubr.bf16.mxu0 %v432
  %606 = vmatmul.mubr.bf16.gmra.mxu0 %v261
  %v607 = vpop.f32.mrf.mxu0
  %v608 = vadd.f32 0.0, %v607
  %v609 = vpop.f32.mrf.mxu0
  %v610 = vadd.f32 0.0, %v609
  %v611 = vpop.f32.mrf.mxu0
  %v612 = vadd.f32 0.0, %v611
  %v613 = vpop.f32.mrf.mxu0
  %v614 = vadd.f32 0.0, %v613
  %615 = vmatprep.mubr.bf16.mxu0 %v435
  %616 = vmatmul.mubr.bf16.gmra.mxu0 %v263
  %v617 = vpop.f32.mrf.mxu0
  %v618 = vadd.f32 0.0, %v617
  %v619 = vpop.f32.mrf.mxu0
  %v620 = vadd.f32 0.0, %v619
  %v621 = vpop.f32.mrf.mxu0
  %v622 = vadd.f32 0.0, %v621
  %v623 = vpop.f32.mrf.mxu0
  %v624 = vadd.f32 0.0, %v623
  %625 = vmatprep.mubr.bf16.mxu0 %v438
  %626 = vmatmul.mubr.bf16.gmra.mxu0 %v265
  %v627 = vpop.f32.mrf.mxu0
  %v628 = vadd.f32 0.0, %v627
  %v629 = vpop.f32.mrf.mxu0
  %v630 = vadd.f32 0.0, %v629
  %v631 = vpop.f32.mrf.mxu0
  %v632 = vadd.f32 0.0, %v631
  %v633 = vpop.f32.mrf.mxu0
  %v634 = vadd.f32 0.0, %v633
  %635 = vmatprep.mubr.bf16.mxu0 %v441
  %636 = vmatmul.mubr.bf16.gmra.mxu0 %v267
  %v637 = vpop.f32.mrf.mxu0
  %v638 = vadd.f32 0.0, %v637
  %v639 = vpop.f32.mrf.mxu0
  %v640 = vadd.f32 0.0, %v639
  %v641 = vpop.f32.mrf.mxu0
  %v642 = vadd.f32 0.0, %v641
  %v643 = vpop.f32.mrf.mxu0
  %v644 = vadd.f32 0.0, %v643
  %645 = vmatprep.mubr.bf16.mxu0 %v444
  %646 = vmatmul.mubr.bf16.gmra.mxu0 %v269
  %v647 = vpop.f32.mrf.mxu0
  %v648 = vadd.f32 0.0, %v647
  %v649 = vpop.f32.mrf.mxu0
  %v650 = vadd.f32 0.0, %v649
  %v651 = vpop.f32.mrf.mxu0
  %v652 = vadd.f32 0.0, %v651
  %v653 = vpop.f32.mrf.mxu0
  %v654 = vadd.f32 0.0, %v653
  %655 = vmatprep.mubr.bf16.mxu0 %v447
  %656 = vmatmul.mubr.bf16.gmra.mxu0 %v271
  %v657 = vpop.f32.mrf.mxu0
  %v658 = vadd.f32 0.0, %v657
  %v659 = vpop.f32.mrf.mxu0
  %v660 = vadd.f32 0.0, %v659
  %v661 = vpop.f32.mrf.mxu0
  %v662 = vadd.f32 0.0, %v661
  %v663 = vpop.f32.mrf.mxu0
  %v664 = vadd.f32 0.0, %v663
  %665 = vmatprep.mubr.bf16.mxu0 %v450
  %666 = vmatmul.mubr.bf16.gmra.mxu0 %v273
  %v667 = vpop.f32.mrf.mxu0
  %v668 = vadd.f32 0.0, %v667
  %v669 = vpop.f32.mrf.mxu0
  %v670 = vadd.f32 0.0, %v669
  %v671 = vpop.f32.mrf.mxu0
  %v672 = vadd.f32 0.0, %v671
  %v673 = vpop.f32.mrf.mxu0
  %v674 = vadd.f32 0.0, %v673
  %675 = vmatprep.mubr.bf16.mxu0 %v453
  %676 = vmatmul.mubr.bf16.gmra.mxu0 %v275
  %v677 = vpop.f32.mrf.mxu0
  %v678 = vadd.f32 0.0, %v677
  %v679 = vpop.f32.mrf.mxu0
  %v680 = vadd.f32 0.0, %v679
  %v681 = vpop.f32.mrf.mxu0
  %v682 = vadd.f32 0.0, %v681
  %v683 = vpop.f32.mrf.mxu0
  %v684 = vadd.f32 0.0, %v683
  %685 = vmatprep.mubr.bf16.mxu0 %v456
  %686 = vmatmul.mubr.bf16.gmra.mxu0 %v277
  %v687 = vpop.f32.mrf.mxu0
  %v688 = vadd.f32 0.0, %v687
  %v689 = vpop.f32.mrf.mxu0
  %v690 = vadd.f32 0.0, %v689
  %v691 = vpop.f32.mrf.mxu0
  %v692 = vadd.f32 0.0, %v691
  %v693 = vpop.f32.mrf.mxu0
  %v694 = vadd.f32 0.0, %v693
  %695 = vmatprep.mubr.bf16.mxu0 %v459
  %696 = vmatmul.mubr.bf16.gmra.mxu0 %v279
  %v697 = vpop.f32.mrf.mxu0
  %v698 = vadd.f32 0.0, %v697
  %v699 = vpop.f32.mrf.mxu0
  %v700 = vadd.f32 0.0, %v699
  %v701 = vpop.f32.mrf.mxu0
  %v702 = vadd.f32 0.0, %v701
  %v703 = vpop.f32.mrf.mxu0
  %v704 = vadd.f32 0.0, %v703
  %705 = vmatprep.mubr.bf16.mxu0 %v462
  %706 = vmatmul.mubr.bf16.gmra.mxu0 %v281
  %v707 = vpop.f32.mrf.mxu0
  %v708 = vadd.f32 0.0, %v707
  %v709 = vpop.f32.mrf.mxu0
  %v710 = vadd.f32 0.0, %v709
  %v711 = vpop.f32.mrf.mxu0
  %v712 = vadd.f32 0.0, %v711
  %v713 = vpop.f32.mrf.mxu0
  %v714 = vadd.f32 0.0, %v713
  %715 = vmatprep.mubr.bf16.mxu0 %v465
  %716 = vmatmul.mubr.bf16.gmra.mxu0 %v283
  %v717 = vpop.f32.mrf.mxu0
  %v718 = vadd.f32 0.0, %v717
  %v719 = vpop.f32.mrf.mxu0
  %v720 = vadd.f32 0.0, %v719
  %v721 = vpop.f32.mrf.mxu0
  %v722 = vadd.f32 0.0, %v721
  %v723 = vpop.f32.mrf.mxu0
  %v724 = vadd.f32 0.0, %v723
  %725 = vmatprep.mubr.bf16.mxu0 %v468
  %726 = vmatmul.mubr.bf16.gmra.mxu0 %v285
  %v727 = vpop.f32.mrf.mxu0
  %v728 = vadd.f32 0.0, %v727
  %v729 = vpop.f32.mrf.mxu0
  %v730 = vadd.f32 0.0, %v729
  %v731 = vpop.f32.mrf.mxu0
  %v732 = vadd.f32 0.0, %v731
  %v733 = vpop.f32.mrf.mxu0
  %v734 = vadd.f32 0.0, %v733
  %735 = vmatprep.mubr.bf16.mxu0 %v471
  %736 = vmatmul.mubr.bf16.gmra.mxu0 %v287
  %v737 = vpop.f32.mrf.mxu0
  %v738 = vadd.f32 0.0, %v737
  %v739 = vpop.f32.mrf.mxu0
  %v740 = vadd.f32 0.0, %v739
  %v741 = vpop.f32.mrf.mxu0
  %v742 = vadd.f32 0.0, %v741
  %v743 = vpop.f32.mrf.mxu0
  %v744 = vadd.f32 0.0, %v743
  %745 = vmatprep.mubr.bf16.mxu0 %v474
  %746 = vmatmul.mubr.bf16.gmra.mxu0 %v289
  %v747 = vpop.f32.mrf.mxu0
  %v748 = vadd.f32 0.0, %v747
  %v749 = vpop.f32.mrf.mxu0
  %v750 = vadd.f32 0.0, %v749
  %v751 = vpop.f32.mrf.mxu0
  %v752 = vadd.f32 0.0, %v751
  %v753 = vpop.f32.mrf.mxu0
  %v754 = vadd.f32 0.0, %v753
  %755 = vdwg.mxu0
  %v756 = vld [vmem:[%s2] sm:$0x1]
  %v758 = vlaneseq
  %v759 = vshrl.u32 %v758, 7
  %v760 = vsub.s32 0, %v759
  %v761 = vrot.slane %v756, %v760
  %v763 = vmax.f32 %v518, %v528
  %v764 = vmax.f32 %v520, %v530
  %v765 = vmax.f32 %v522, %v532
  %v766 = vmax.f32 %v524, %v534
  %v767 = vmax.f32 %v763, %v764
  %v768 = vmax.f32 %v765, %v766
  %v769 = vadd.f32 %v767, %v761
  %v770 = vadd.f32 %v768, %v761
  %v771 = vmax.f32 %v769, 0.0
  %v772 = vmax.f32 %v770, 0.0
  %v773 = vpack.c.bf16 %v772, %v771
  %v775 = vunpack.c.l.b16 %v773
  %v776 = vunpack.c.h.b16 %v773
  %v777 = vpack.c.b16 %v775, %v775
  %v778 = vpack.c.b16 %v776, %v776
  %781 = vst [vmem:[#allocation2] sm:$0xf] %v777
  %782 = vst [vmem:[#allocation2 + $0x14] sm:$0xf] %v778
  %v783 = vmax.f32 %v538, %v548
  %v784 = vmax.f32 %v540, %v550
  %v785 = vmax.f32 %v542, %v552
  %v786 = vmax.f32 %v544, %v554
  %v787 = vmax.f32 %v783, %v784
  %v788 = vmax.f32 %v785, %v786
  %v789 = vadd.f32 %v787, %v761
  %v790 = vadd.f32 %v788, %v761
  %v791 = vmax.f32 %v789, 0.0
  %v792 = vmax.f32 %v790, 0.0
  %v793 = vpack.c.bf16 %v792, %v791
  %v795 = vunpack.c.l.b16 %v793
  %v796 = vunpack.c.h.b16 %v793
  %v797 = vpack.c.b16 %v795, %v795
  %v798 = vpack.c.b16 %v796, %v796
  %801 = vst [vmem:[#allocation2 + $0x28] sm:$0xf] %v797
  %802 = vst [vmem:[#allocation2 + $0x3c] sm:$0xf] %v798
  %803 = vst [vmem:[#allocation2 + $0x4] sm:$0xf] %v797
  %804 = vst [vmem:[#allocation2 + $0x18] sm:$0xf] %v798
  %v805 = vmax.f32 %v558, %v568
  %v806 = vmax.f32 %v560, %v570
  %v807 = vmax.f32 %v562, %v572
  %v808 = vmax.f32 %v564, %v574
  %v809 = vmax.f32 %v805, %v806
  %v810 = vmax.f32 %v807, %v808
  %v811 = vadd.f32 %v809, %v761
  %v812 = vadd.f32 %v810, %v761
  %v813 = vmax.f32 %v811, 0.0
  %v814 = vmax.f32 %v812, 0.0
  %v815 = vpack.c.bf16 %v814, %v813
  %v817 = vunpack.c.l.b16 %v815
  %v818 = vunpack.c.h.b16 %v815
  %v819 = vpack.c.b16 %v817, %v817
  %v820 = vpack.c.b16 %v818, %v818
  %823 = vst [vmem:[#allocation2 + $0x50] sm:$0xf] %v819
  %824 = vst [vmem:[#allocation2 + $0x64] sm:$0xf] %v820
  %825 = vst [vmem:[#allocation2 + $0x2c] sm:$0xf] %v819
  %826 = vst [vmem:[#allocation2 + $0x40] sm:$0xf] %v820
  %827 = vst [vmem:[#allocation2 + $0x8] sm:$0xf] %v819
  %828 = vst [vmem:[#allocation2 + $0x1c] sm:$0xf] %v820
  %v829 = vmax.f32 %v578, %v588
  %v830 = vmax.f32 %v580, %v590
  %v831 = vmax.f32 %v582, %v592
  %v832 = vmax.f32 %v584, %v594
  %v833 = vmax.f32 %v829, %v830
  %v834 = vmax.f32 %v831, %v832
  %v835 = vadd.f32 %v833, %v761
  %v836 = vadd.f32 %v834, %v761
  %v837 = vmax.f32 %v835, 0.0
  %v838 = vmax.f32 %v836, 0.0
  %v839 = vpack.c.bf16 %v838, %v837
  %v841 = vunpack.c.l.b16 %v839
  %v842 = vunpack.c.h.b16 %v839
  %v843 = vpack.c.b16 %v841, %v841
  %v844 = vpack.c.b16 %v842, %v842
  %847 = vst [vmem:[#allocation2 + $0x78] sm:$0xf] %v843
  %848 = vst [vmem:[#allocation2 + $0x8c] sm:$0xf] %v844
  %849 = vst [vmem:[#allocation2 + $0x54] sm:$0xf] %v843
  %850 = vst [vmem:[#allocation2 + $0x68] sm:$0xf] %v844
  %851 = vst [vmem:[#allocation2 + $0x30] sm:$0xf] %v843
  %852 = vst [vmem:[#allocation2 + $0x44] sm:$0xf] %v844
  %853 = vst [vmem:[#allocation2 + $0xc] sm:$0xf] %v843
  %854 = vst [vmem:[#allocation2 + $0x20] sm:$0xf] %v844
  %v855 = vmax.f32 %v598, %v608
  %v856 = vmax.f32 %v600, %v610
  %v857 = vmax.f32 %v602, %v612
  %v858 = vmax.f32 %v604, %v614
  %v859 = vmax.f32 %v855, %v856
  %v860 = vmax.f32 %v857, %v858
  %v861 = vadd.f32 %v859, %v761
  %v862 = vadd.f32 %v860, %v761
  %v863 = vmax.f32 %v861, 0.0
  %v864 = vmax.f32 %v862, 0.0
  %v865 = vpack.c.bf16 %v864, %v863
  %v867 = vunpack.c.l.b16 %v865
  %v868 = vunpack.c.h.b16 %v865
  %v869 = vpack.c.b16 %v867, %v867
  %v870 = vpack.c.b16 %v868, %v868
  %873 = vst [vmem:[#allocation2 + $0xa0] sm:$0xf] %v869
  %874 = vst [vmem:[#allocation2 + $0xb4] sm:$0xf] %v870
  %875 = vst [vmem:[#allocation2 + $0x7c] sm:$0xf] %v869
  %876 = vst [vmem:[#allocation2 + $0x90] sm:$0xf] %v870
  %877 = vst [vmem:[#allocation2 + $0x58] sm:$0xf] %v869
  %878 = vst [vmem:[#allocation2 + $0x6c] sm:$0xf] %v870
  %879 = vst [vmem:[#allocation2 + $0x34] sm:$0xf] %v869
  %880 = vst [vmem:[#allocation2 + $0x48] sm:$0xf] %v870
  %881 = vst [vmem:[#allocation2 + $0x10] sm:$0xf] %v869
  %882 = vst [vmem:[#allocation2 + $0x24] sm:$0xf] %v870
  %v883 = vmax.f32 %v618, %v628
  %v884 = vmax.f32 %v620, %v630
  %v885 = vmax.f32 %v622, %v632
  %v886 = vmax.f32 %v624, %v634
  %v887 = vmax.f32 %v883, %v884
  %v888 = vmax.f32 %v885, %v886
  %v889 = vadd.f32 %v887, %v761
  %v890 = vadd.f32 %v888, %v761
  %v891 = vmax.f32 %v889, 0.0
  %v892 = vmax.f32 %v890, 0.0
  %v893 = vpack.c.bf16 %v892, %v891
  %v895 = vunpack.c.l.b16 %v893
  %v896 = vunpack.c.h.b16 %v893
  %v897 = vpack.c.b16 %v895, %v895
  %v898 = vpack.c.b16 %v896, %v896
  %901 = vst [vmem:[#allocation2 + $0xc8] sm:$0xf] %v897
  %902 = vst [vmem:[#allocation2 + $0xdc] sm:$0xf] %v898
  %903 = vst [vmem:[#allocation2 + $0xa4] sm:$0xf] %v897
  %904 = vst [vmem:[#allocation2 + $0xb8] sm:$0xf] %v898
  %905 = vst [vmem:[#allocation2 + $0x80] sm:$0xf] %v897
  %906 = vst [vmem:[#allocation2 + $0x94] sm:$0xf] %v898
  %907 = vst [vmem:[#allocation2 + $0x5c] sm:$0xf] %v897
  %908 = vst [vmem:[#allocation2 + $0x70] sm:$0xf] %v898
  %909 = vst [vmem:[#allocation2 + $0x38] sm:$0xf] %v897
  %910 = vst [vmem:[#allocation2 + $0x4c] sm:$0xf] %v898
  %v911 = vmax.f32 %v638, %v648
  %v912 = vmax.f32 %v640, %v650
  %v913 = vmax.f32 %v642, %v652
  %v914 = vmax.f32 %v644, %v654
  %v915 = vmax.f32 %v911, %v912
  %v916 = vmax.f32 %v913, %v914
  %v917 = vadd.f32 %v915, %v761
  %v918 = vadd.f32 %v916, %v761
  %v919 = vmax.f32 %v917, 0.0
  %v920 = vmax.f32 %v918, 0.0
  %v921 = vpack.c.bf16 %v920, %v919
  %v923 = vunpack.c.l.b16 %v921
  %v924 = vunpack.c.h.b16 %v921
  %v925 = vpack.c.b16 %v923, %v923
  %v926 = vpack.c.b16 %v924, %v924
  %929 = vst [vmem:[#allocation2 + $0xf0] sm:$0xf] %v925
  %930 = vst [vmem:[#allocation2 + $0x104] sm:$0xf] %v926
  %931 = vst [vmem:[#allocation2 + $0xcc] sm:$0xf] %v925
  %932 = vst [vmem:[#allocation2 + $0xe0] sm:$0xf] %v926
  %933 = vst [vmem:[#allocation2 + $0xa8] sm:$0xf] %v925
  %934 = vst [vmem:[#allocation2 + $0xbc] sm:$0xf] %v926
  %935 = vst [vmem:[#allocation2 + $0x84] sm:$0xf] %v925
  %936 = vst [vmem:[#allocation2 + $0x98] sm:$0xf] %v926
  %937 = vst [vmem:[#allocation2 + $0x60] sm:$0xf] %v925
  %938 = vst [vmem:[#allocation2 + $0x74] sm:$0xf] %v926
  %v939 = vmax.f32 %v658, %v668
  %v940 = vmax.f32 %v660, %v670
  %v941 = vmax.f32 %v662, %v672
  %v942 = vmax.f32 %v664, %v674
  %v943 = vmax.f32 %v939, %v940
  %v944 = vmax.f32 %v941, %v942
  %v945 = vadd.f32 %v943, %v761
  %v946 = vadd.f32 %v944, %v761
  %v947 = vmax.f32 %v945, 0.0
  %v948 = vmax.f32 %v946, 0.0
  %v949 = vpack.c.bf16 %v948, %v947
  %v951 = vunpack.c.l.b16 %v949
  %v952 = vunpack.c.h.b16 %v949
  %v953 = vpack.c.b16 %v951, %v951
  %v954 = vpack.c.b16 %v952, %v952
  %957 = vst [vmem:[#allocation2 + $0x118] sm:$0xf] %v953
  %958 = vst [vmem:[#allocation2 + $0x12c] sm:$0xf] %v954
  %959 = vst [vmem:[#allocation2 + $0xf4] sm:$0xf] %v953
  %960 = vst [vmem:[#allocation2 + $0x108] sm:$0xf] %v954
  %961 = vst [vmem:[#allocation2 + $0xd0] sm:$0xf] %v953
  %962 = vst [vmem:[#allocation2 + $0xe4] sm:$0xf] %v954
  %963 = vst [vmem:[#allocation2 + $0xac] sm:$0xf] %v953
  %964 = vst [vmem:[#allocation2 + $0xc0] sm:$0xf] %v954
  %965 = vst [vmem:[#allocation2 + $0x88] sm:$0xf] %v953
  %966 = vst [vmem:[#allocation2 + $0x9c] sm:$0xf] %v954
  %v967 = vmax.f32 %v678, %v688
  %v968 = vmax.f32 %v680, %v690
  %v969 = vmax.f32 %v682, %v692
  %v970 = vmax.f32 %v684, %v694
  %v971 = vmax.f32 %v967, %v968
  %v972 = vmax.f32 %v969, %v970
  %v973 = vadd.f32 %v971, %v761
  %v974 = vadd.f32 %v972, %v761
  %v975 = vmax.f32 %v973, 0.0
  %v976 = vmax.f32 %v974, 0.0
  %v977 = vpack.c.bf16 %v976, %v975
  %v979 = vunpack.c.l.b16 %v977
  %v980 = vunpack.c.h.b16 %v977
  %v981 = vpack.c.b16 %v979, %v979
  %v982 = vpack.c.b16 %v980, %v980
  %985 = vst [vmem:[#allocation2 + $0x11c] sm:$0xf] %v981
  %986 = vst [vmem:[#allocation2 + $0x130] sm:$0xf] %v982
  %987 = vst [vmem:[#allocation2 + $0xf8] sm:$0xf] %v981
  %988 = vst [vmem:[#allocation2 + $0x10c] sm:$0xf] %v982
  %989 = vst [vmem:[#allocation2 + $0xd4] sm:$0xf] %v981
  %990 = vst [vmem:[#allocation2 + $0xe8] sm:$0xf] %v982
  %991 = vst [vmem:[#allocation2 + $0xb0] sm:$0xf] %v981
  %992 = vst [vmem:[#allocation2 + $0xc4] sm:$0xf] %v982
  %v993 = vmax.f32 %v698, %v708
  %v994 = vmax.f32 %v700, %v710
  %v995 = vmax.f32 %v702, %v712
  %v996 = vmax.f32 %v704, %v714
  %v997 = vmax.f32 %v993, %v994
  %v998 = vmax.f32 %v995, %v996
  %v999 = vadd.f32 %v997, %v761
  %v1000 = vadd.f32 %v998, %v761
  %v1001 = vmax.f32 %v999, 0.0
  %v1002 = vmax.f32 %v1000, 0.0
  %v1003 = vpack.c.bf16 %v1002, %v1001
  %v1005 = vunpack.c.l.b16 %v1003
  %v1006 = vunpack.c.h.b16 %v1003
  %v1007 = vpack.c.b16 %v1005, %v1005
  %v1008 = vpack.c.b16 %v1006, %v1006
  %1011 = vst [vmem:[#allocation2 + $0x120] sm:$0xf] %v1007
  %1012 = vst [vmem:[#allocation2 + $0x134] sm:$0xf] %v1008
  %1013 = vst [vmem:[#allocation2 + $0xfc] sm:$0xf] %v1007
  %1014 = vst [vmem:[#allocation2 + $0x110] sm:$0xf] %v1008
  %1015 = vst [vmem:[#allocation2 + $0xd8] sm:$0xf] %v1007
  %1016 = vst [vmem:[#allocation2 + $0xec] sm:$0xf] %v1008
  %v1017 = vmax.f32 %v718, %v728
  %v1018 = vmax.f32 %v720, %v730
  %v1019 = vmax.f32 %v722, %v732
  %v1020 = vmax.f32 %v724, %v734
  %v1021 = vmax.f32 %v1017, %v1018
  %v1022 = vmax.f32 %v1019, %v1020
  %v1023 = vadd.f32 %v1021, %v761
  %v1024 = vadd.f32 %v1022, %v761
  %v1025 = vmax.f32 %v1023, 0.0
  %v1026 = vmax.f32 %v1024, 0.0
  %v1027 = vpack.c.bf16 %v1026, %v1025
  %v1029 = vunpack.c.l.b16 %v1027
  %v1030 = vunpack.c.h.b16 %v1027
  %v1031 = vpack.c.b16 %v1029, %v1029
  %v1032 = vpack.c.b16 %v1030, %v1030
  %1035 = vst [vmem:[#allocation2 + $0x124] sm:$0xf] %v1031
  %1036 = vst [vmem:[#allocation2 + $0x138] sm:$0xf] %v1032
  %1037 = vst [vmem:[#allocation2 + $0x100] sm:$0xf] %v1031
  %1038 = vst [vmem:[#allocation2 + $0x114] sm:$0xf] %v1032
  %v1039 = vmax.f32 %v738, %v748
  %v1040 = vmax.f32 %v740, %v750
  %v1041 = vmax.f32 %v742, %v752
  %v1042 = vmax.f32 %v744, %v754
  %v1043 = vmax.f32 %v1039, %v1040
  %v1044 = vmax.f32 %v1041, %v1042
  %v1045 = vadd.f32 %v1043, %v761
  %v1046 = vadd.f32 %v1044, %v761
  %v1047 = vmax.f32 %v1045, 0.0
  %v1048 = vmax.f32 %v1046, 0.0
  %v1049 = vpack.c.bf16 %v1048, %v1047
  %v1051 = vunpack.c.l.b16 %v1049
  %v1052 = vunpack.c.h.b16 %v1049
  %v1053 = vpack.c.b16 %v1051, %v1051
  %v1054 = vpack.c.b16 %v1052, %v1052
  %1057 = vst [vmem:[#allocation2 + $0x128] sm:$0xf] %v1053
  %1058 = vst [vmem:[#allocation2 + $0x13c] sm:$0xf] %v1054
  %v1059 = vld [vmem:[#allocation2] sm:$0xff]
  %v1060 = vld [vmem:[#allocation2 + $0x8] sm:$0xff]
  %v1061 = vld [vmem:[#allocation2 + $0x10] sm:$0xf]
  %v1062 = vld [vmem:[#allocation2 + $0x14] sm:$0xff]
  %v1063 = vld [vmem:[#allocation2 + $0x1c] sm:$0xff]
  %v1064 = vld [vmem:[#allocation2 + $0x24] sm:$0xf]
  %v1065 = vld [vmem:[#allocation2 + $0x28] sm:$0xff]
  %v1066 = vld [vmem:[#allocation2 + $0x30] sm:$0xff]
  %v1067 = vld [vmem:[#allocation2 + $0x38] sm:$0xf]
  %v1068 = vld [vmem:[#allocation2 + $0x3c] sm:$0xff]
  %v1069 = vld [vmem:[#allocation2 + $0x44] sm:$0xff]
  %v1070 = vld [vmem:[#allocation2 + $0x4c] sm:$0xf]
  %v1071 = vld [vmem:[#allocation2 + $0x50] sm:$0xff]
  %v1072 = vld [vmem:[#allocation2 + $0x58] sm:$0xff]
  %v1073 = vld [vmem:[#allocation2 + $0x60] sm:$0xf]
  %v1074 = vld [vmem:[#allocation2 + $0x64] sm:$0xff]
  %v1075 = vld [vmem:[#allocation2 + $0x6c] sm:$0xff]
  %v1076 = vld [vmem:[#allocation2 + $0x74] sm:$0xf]
  %v1077 = vld [vmem:[#allocation2 + $0x78] sm:$0xff]
  %v1078 = vld [vmem:[#allocation2 + $0x80] sm:$0xff]
  %v1079 = vld [vmem:[#allocation2 + $0x88] sm:$0xf]
  %v1080 = vld [vmem:[#allocation2 + $0x8c] sm:$0xff]
  %v1081 = vld [vmem:[#allocation2 + $0x94] sm:$0xff]
  %v1082 = vld [vmem:[#allocation2 + $0x9c] sm:$0xf]
  %v1083 = vld [vmem:[#allocation2 + $0xa0] sm:$0xff]
  %v1084 = vld [vmem:[#allocation2 + $0xa8] sm:$0xff]
  %v1085 = vld [vmem:[#allocation2 + $0xb0] sm:$0xf]
  %v1086 = vld [vmem:[#allocation2 + $0xb4] sm:$0xff]
  %v1087 = vld [vmem:[#allocation2 + $0xbc] sm:$0xff]
  %v1088 = vld [vmem:[#allocation2 + $0xc4] sm:$0xf]
  %v1089 = vld [vmem:[#allocation2 + $0xc8] sm:$0xff]
  %v1090 = vld [vmem:[#allocation2 + $0xd0] sm:$0xff]
  %v1091 = vld [vmem:[#allocation2 + $0xd8] sm:$0xf]
  %v1092 = vld [vmem:[#allocation2 + $0xdc] sm:$0xff]
  %v1093 = vld [vmem:[#allocation2 + $0xe4] sm:$0xff]
  %v1094 = vld [vmem:[#allocation2 + $0xec] sm:$0xf]
  %v1095 = vld [vmem:[#allocation2 + $0xf0] sm:$0xff]
  %v1096 = vld [vmem:[#allocation2 + $0xf8] sm:$0xff]
  %v1097 = vld [vmem:[#allocation2 + $0x100] sm:$0xf]
  %v1098 = vld [vmem:[#allocation2 + $0x104] sm:$0xff]
  %v1099 = vld [vmem:[#allocation2 + $0x10c] sm:$0xff]
  %v1100 = vld [vmem:[#allocation2 + $0x114] sm:$0xf]
  %v1101 = vld [vmem:[#allocation2 + $0x118] sm:$0xff]
  %v1102 = vld [vmem:[#allocation2 + $0x120] sm:$0xff]
  %v1103 = vld [vmem:[#allocation2 + $0x128] sm:$0xf]
  %v1104 = vld [vmem:[#allocation2 + $0x12c] sm:$0xff]
  %v1105 = vld [vmem:[#allocation2 + $0x134] sm:$0xff]
  %v1106 = vld [vmem:[#allocation2 + $0x13c] sm:$0xf]
  %v1107 = vld [vmem:[%s3] sm:$0xff]
  %v1108 = vld [vmem:[%s3 + $0x8] sm:$0xff]
  %v1109 = vld [vmem:[%s3 + $0x10] sm:$0xff]
  %v1110 = vld [vmem:[%s3 + $0x18] sm:$0xff]
  %v1111 = vld [vmem:[%s3 + $0x20] sm:$0xff]
  %v1112 = vld [vmem:[%s3 + $0x28] sm:$0xff]
  %v1113 = vld [vmem:[%s3 + $0x30] sm:$0xff]
  %v1114 = vld [vmem:[%s3 + $0x38] sm:$0xff]
  %v1115 = vld [vmem:[%s3 + $0x40] sm:$0xff]
  %v1116 = vld [vmem:[%s3 + $0x48] sm:$0xff]
  %v1117 = vld [vmem:[%s3 + $0x50] sm:$0xff]
  %v1118 = vld [vmem:[%s3 + $0x58] sm:$0xff]
  %v1119 = vld [vmem:[%s3 + $0x60] sm:$0xff]
  %v1120 = vld [vmem:[%s3 + $0x68] sm:$0xff]
  %v1121 = vld [vmem:[%s3 + $0x70] sm:$0xff]
  %v1122 = vld [vmem:[%s3 + $0x78] sm:$0xff]
  %v1123 = vld [vmem:[%s3 + $0x80] sm:$0xff]
  %v1124 = vld [vmem:[%s3 + $0x88] sm:$0xff]
  %v1125 = vld [vmem:[%s3 + $0x90] sm:$0xff]
  %v1126 = vld [vmem:[%s3 + $0x98] sm:$0xff]
  %v1127 = vld [vmem:[%s3 + $0xa0] sm:$0xff]
  %v1128 = vld [vmem:[%s3 + $0xa8] sm:$0xff]
  %v1129 = vld [vmem:[%s3 + $0xb0] sm:$0xff]
  %v1130 = vld [vmem:[%s3 + $0xb8] sm:$0xff]
  %v1131 = vld [vmem:[%s3 + $0xc0] sm:$0xff]
  %v1132 = vld [vmem:[%s3 + $0xc8] sm:$0xff]
  %v1133 = vld [vmem:[%s3 + $0xd0] sm:$0xff]
  %v1134 = vld [vmem:[%s3 + $0xd8] sm:$0xff]
  %v1135 = vld [vmem:[%s3 + $0xe0] sm:$0xff]
  %v1136 = vld [vmem:[%s3 + $0xe8] sm:$0xff]
  %v1137 = vld [vmem:[%s3 + $0xf0] sm:$0xff]
  %v1138 = vld [vmem:[%s3 + $0xf8] sm:$0xff]
  %v1139 = vld [vmem:[%s3 + $0x100] sm:$0xff]
  %v1140 = vld [vmem:[%s3 + $0x108] sm:$0xff]
  %v1141 = vld [vmem:[%s3 + $0x110] sm:$0xff]
  %v1142 = vld [vmem:[%s3 + $0x118] sm:$0xff]
  %v1143 = vld [vmem:[%s3 + $0x120] sm:$0xff]
  %v1144 = vld [vmem:[%s3 + $0x128] sm:$0xff]
  %v1145 = vld [vmem:[%s3 + $0x130] sm:$0xff]
  %v1146 = vld [vmem:[%s3 + $0x138] sm:$0xff]
  %v1147 = vld [vmem:[%s3 + $0x140] sm:$0xff]
  %v1148 = vld [vmem:[%s3 + $0x148] sm:$0xff]
  %v1149 = vld [vmem:[%s3 + $0x150] sm:$0xff]
  %v1150 = vld [vmem:[%s3 + $0x158] sm:$0xff]
  %v1151 = vld [vmem:[%s3 + $0x160] sm:$0xff]
  %v1152 = vld [vmem:[%s3 + $0x168] sm:$0xff]
  %v1153 = vld [vmem:[%s3 + $0x170] sm:$0xff]
  %v1154 = vld [vmem:[%s3 + $0x178] sm:$0xff]
  %v1155 = vld [vmem:[%s3 + $0x180] sm:$0xff]
  %v1156 = vld [vmem:[%s3 + $0x188] sm:$0xff]
  %v1157 = vld [vmem:[%s3 + $0x190] sm:$0xff]
  %v1158 = vld [vmem:[%s3 + $0x198] sm:$0xff]
  %v1159 = vld [vmem:[%s3 + $0x1a0] sm:$0xff]
  %v1160 = vld [vmem:[%s3 + $0x1a8] sm:$0xff]
  %v1161 = vld [vmem:[%s3 + $0x1b0] sm:$0xff]
  %v1162 = vld [vmem:[%s3 + $0x1b8] sm:$0xff]
  %v1163 = vld [vmem:[%s3 + $0x1c0] sm:$0xff]
  %v1164 = vld [vmem:[%s3 + $0x1c8] sm:$0xff]
  %v1165 = vld [vmem:[%s3 + $0x1d0] sm:$0xff]
  %v1166 = vld [vmem:[%s3 + $0x1d8] sm:$0xff]
  %v1167 = vld [vmem:[%s3 + $0x1e0] sm:$0xff]
  %v1168 = vld [vmem:[%s3 + $0x1e8] sm:$0xff]
  %v1169 = vld [vmem:[%s3 + $0x1f0] sm:$0xff]
  %v1170 = vld [vmem:[%s3 + $0x1f8] sm:$0xff]
  %v1171 = vld [vmem:[%s3 + $0x200] sm:$0xff]
  %v1172 = vld [vmem:[%s3 + $0x208] sm:$0xff]
  %v1173 = vld [vmem:[%s3 + $0x210] sm:$0xff]
  %v1174 = vld [vmem:[%s3 + $0x218] sm:$0xff]
  %v1175 = vld [vmem:[%s3 + $0x220] sm:$0xff]
  %v1176 = vld [vmem:[%s3 + $0x228] sm:$0xff]
  %v1177 = vld [vmem:[%s3 + $0x230] sm:$0xff]
  %v1178 = vld [vmem:[%s3 + $0x238] sm:$0xff]
  %v1179 = vld [vmem:[%s3 + $0x240] sm:$0xff]
  %v1180 = vld [vmem:[%s3 + $0x248] sm:$0xff]
  %v1181 = vld [vmem:[%s3 + $0x250] sm:$0xff]
  %v1182 = vld [vmem:[%s3 + $0x258] sm:$0xff]
  %v1183 = vld [vmem:[%s3 + $0x260] sm:$0xff]
  %v1184 = vld [vmem:[%s3 + $0x268] sm:$0xff]
  %v1185 = vld [vmem:[%s3 + $0x270] sm:$0xff]
  %v1186 = vld [vmem:[%s3 + $0x278] sm:$0xff]
  %v1235 = vunpack.c.l.b16 %v1059
  %v1236 = vunpack.c.h.b16 %v1059
  %v1237 = vunpack.c.l.b16 %v1060
  %v1238 = vunpack.c.h.b16 %v1060
  %v1239 = vunpack.c.l.b16 %v1061
  %v1240 = vunpack.c.l.b16 %v1062
  %v1241 = vunpack.c.h.b16 %v1062
  %v1242 = vunpack.c.l.b16 %v1063
  %v1243 = vunpack.c.h.b16 %v1063
  %v1244 = vunpack.c.l.b16 %v1064
  %v1245 = vunpack.c.l.b16 %v1065
  %v1246 = vunpack.c.h.b16 %v1065
  %v1247 = vunpack.c.l.b16 %v1066
  %v1248 = vunpack.c.h.b16 %v1066
  %v1249 = vunpack.c.l.b16 %v1067
  %v1250 = vunpack.c.l.b16 %v1068
  %v1251 = vunpack.c.h.b16 %v1068
  %v1252 = vunpack.c.l.b16 %v1069
  %v1253 = vunpack.c.h.b16 %v1069
  %v1254 = vunpack.c.l.b16 %v1070
  %v1255 = vunpack.c.l.b16 %v1071
  %v1256 = vunpack.c.h.b16 %v1071
  %v1257 = vunpack.c.l.b16 %v1072
  %v1258 = vunpack.c.h.b16 %v1072
  %v1259 = vunpack.c.l.b16 %v1073
  %v1260 = vunpack.c.l.b16 %v1074
  %v1261 = vunpack.c.h.b16 %v1074
  %v1262 = vunpack.c.l.b16 %v1075
  %v1263 = vunpack.c.h.b16 %v1075
  %v1264 = vunpack.c.l.b16 %v1076
  %v1265 = vunpack.c.l.b16 %v1077
  %v1266 = vunpack.c.h.b16 %v1077
  %v1267 = vunpack.c.l.b16 %v1078
  %v1268 = vunpack.c.h.b16 %v1078
  %v1269 = vunpack.c.l.b16 %v1079
  %v1270 = vunpack.c.l.b16 %v1080
  %v1271 = vunpack.c.h.b16 %v1080
  %v1272 = vunpack.c.l.b16 %v1081
  %v1273 = vunpack.c.h.b16 %v1081
  %v1274 = vunpack.c.l.b16 %v1082
  %v1275 = vunpack.c.l.b16 %v1083
  %v1276 = vunpack.c.h.b16 %v1083
  %v1277 = vunpack.c.l.b16 %v1084
  %v1278 = vunpack.c.h.b16 %v1084
  %v1279 = vunpack.c.l.b16 %v1085
  %v1280 = vunpack.c.l.b16 %v1086
  %v1281 = vunpack.c.h.b16 %v1086
  %v1282 = vunpack.c.l.b16 %v1087
  %v1283 = vunpack.c.h.b16 %v1087
  %v1284 = vunpack.c.l.b16 %v1088
  %v1285 = vunpack.c.l.b16 %v1089
  %v1286 = vunpack.c.h.b16 %v1089
  %v1287 = vunpack.c.l.b16 %v1090
  %v1288 = vunpack.c.h.b16 %v1090
  %v1289 = vunpack.c.l.b16 %v1091
  %v1290 = vunpack.c.l.b16 %v1092
  %v1291 = vunpack.c.h.b16 %v1092
  %v1292 = vunpack.c.l.b16 %v1093
  %v1293 = vunpack.c.h.b16 %v1093
  %v1294 = vunpack.c.l.b16 %v1094
  %v1295 = vunpack.c.l.b16 %v1095
  %v1296 = vunpack.c.h.b16 %v1095
  %v1297 = vunpack.c.l.b16 %v1096
  %v1298 = vunpack.c.h.b16 %v1096
  %v1299 = vunpack.c.l.b16 %v1097
  %v1300 = vunpack.c.l.b16 %v1098
  %v1301 = vunpack.c.h.b16 %v1098
  %v1302 = vunpack.c.l.b16 %v1099
  %v1303 = vunpack.c.h.b16 %v1099
  %v1304 = vunpack.c.l.b16 %v1100
  %v1305 = vunpack.c.l.b16 %v1101
  %v1306 = vunpack.c.h.b16 %v1101
  %v1307 = vunpack.c.l.b16 %v1102
  %v1308 = vunpack.c.h.b16 %v1102
  %v1309 = vunpack.c.l.b16 %v1103
  %v1310 = vunpack.c.l.b16 %v1104
  %v1311 = vunpack.c.h.b16 %v1104
  %v1312 = vunpack.c.l.b16 %v1105
  %v1313 = vunpack.c.h.b16 %v1105
  %v1314 = vunpack.c.l.b16 %v1106
  %v1315 = vpack.c.b16 %v1240, %v1235
  %v1316 = vpack.c.b16 %v1241, %v1236
  %v1317 = vpack.c.b16 %v1242, %v1237
  %v1318 = vpack.c.b16 %v1243, %v1238
  %v1319 = vpack.c.b16 %v1244, %v1239
  %v1320 = vpack.c.b16 %v1250, %v1245
  %v1321 = vpack.c.b16 %v1251, %v1246
  %v1322 = vpack.c.b16 %v1252, %v1247
  %v1323 = vpack.c.b16 %v1253, %v1248
  %v1324 = vpack.c.b16 %v1254, %v1249
  %v1325 = vpack.c.b16 %v1260, %v1255
  %v1326 = vpack.c.b16 %v1261, %v1256
  %v1327 = vpack.c.b16 %v1262, %v1257
  %v1328 = vpack.c.b16 %v1263, %v1258
  %v1329 = vpack.c.b16 %v1264, %v1259
  %v1330 = vpack.c.b16 %v1270, %v1265
  %v1331 = vpack.c.b16 %v1271, %v1266
  %v1332 = vpack.c.b16 %v1272, %v1267
  %v1333 = vpack.c.b16 %v1273, %v1268
  %v1334 = vpack.c.b16 %v1274, %v1269
  %v1335 = vpack.c.b16 %v1280, %v1275
  %v1336 = vpack.c.b16 %v1281, %v1276
  %v1337 = vpack.c.b16 %v1282, %v1277
  %v1338 = vpack.c.b16 %v1283, %v1278
  %v1339 = vpack.c.b16 %v1284, %v1279
  %v1340 = vpack.c.b16 %v1290, %v1285
  %v1341 = vpack.c.b16 %v1291, %v1286
  %v1342 = vpack.c.b16 %v1292, %v1287
  %v1343 = vpack.c.b16 %v1293, %v1288
  %v1344 = vpack.c.b16 %v1294, %v1289
  %v1345 = vpack.c.b16 %v1300, %v1295
  %v1346 = vpack.c.b16 %v1301, %v1296
  %v1347 = vpack.c.b16 %v1302, %v1297
  %v1348 = vpack.c.b16 %v1303, %v1298
  %v1349 = vpack.c.b16 %v1304, %v1299
  %v1350 = vpack.c.b16 %v1310, %v1305
  %v1351 = vpack.c.b16 %v1311, %v1306
  %v1352 = vpack.c.b16 %v1312, %v1307
  %v1353 = vpack.c.b16 %v1313, %v1308
  %v1354 = vpack.c.b16 %v1314, %v1309
  %v1475 = vunpack.c.l.b16 %v1107
  %v1476 = vunpack.c.h.b16 %v1107
  %v1477 = vunpack.c.l.b16 %v1108
  %v1478 = vunpack.c.h.b16 %v1108
  %v1479 = vunpack.c.l.b16 %v1109
  %v1480 = vunpack.c.h.b16 %v1109
  %v1481 = vunpack.c.l.b16 %v1110
  %v1482 = vunpack.c.h.b16 %v1110
  %v1483 = vunpack.c.l.b16 %v1111
  %v1484 = vunpack.c.h.b16 %v1111
  %v1485 = vunpack.c.l.b16 %v1112
  %v1486 = vunpack.c.h.b16 %v1112
  %v1487 = vunpack.c.l.b16 %v1113
  %v1488 = vunpack.c.h.b16 %v1113
  %v1489 = vunpack.c.l.b16 %v1114
  %v1490 = vunpack.c.h.b16 %v1114
  %v1491 = vunpack.c.l.b16 %v1115
  %v1492 = vunpack.c.h.b16 %v1115
  %v1493 = vunpack.c.l.b16 %v1116
  %v1494 = vunpack.c.h.b16 %v1116
  %v1495 = vunpack.c.l.b16 %v1117
  %v1496 = vunpack.c.h.b16 %v1117
  %v1497 = vunpack.c.l.b16 %v1118
  %v1498 = vunpack.c.h.b16 %v1118
  %v1499 = vunpack.c.l.b16 %v1119
  %v1500 = vunpack.c.h.b16 %v1119
  %v1501 = vunpack.c.l.b16 %v1120
  %v1502 = vunpack.c.h.b16 %v1120
  %v1503 = vunpack.c.l.b16 %v1121
  %v1504 = vunpack.c.h.b16 %v1121
  %v1505 = vunpack.c.l.b16 %v1122
  %v1506 = vunpack.c.h.b16 %v1122
  %v1507 = vunpack.c.l.b16 %v1123
  %v1508 = vunpack.c.h.b16 %v1123
  %v1509 = vunpack.c.l.b16 %v1124
  %v1510 = vunpack.c.h.b16 %v1124
  %v1511 = vunpack.c.l.b16 %v1125
  %v1512 = vunpack.c.h.b16 %v1125
  %v1513 = vunpack.c.l.b16 %v1126
  %v1514 = vunpack.c.h.b16 %v1126
  %v1515 = vunpack.c.l.b16 %v1127
  %v1516 = vunpack.c.h.b16 %v1127
  %v1517 = vunpack.c.l.b16 %v1128
  %v1518 = vunpack.c.h.b16 %v1128
  %v1519 = vunpack.c.l.b16 %v1129
  %v1520 = vunpack.c.h.b16 %v1129
  %v1521 = vunpack.c.l.b16 %v1130
  %v1522 = vunpack.c.h.b16 %v1130
  %v1523 = vunpack.c.l.b16 %v1131
  %v1524 = vunpack.c.h.b16 %v1131
  %v1525 = vunpack.c.l.b16 %v1132
  %v1526 = vunpack.c.h.b16 %v1132
  %v1527 = vunpack.c.l.b16 %v1133
  %v1528 = vunpack.c.h.b16 %v1133
  %v1529 = vunpack.c.l.b16 %v1134
  %v1530 = vunpack.c.h.b16 %v1134
  %v1531 = vunpack.c.l.b16 %v1135
  %v1532 = vunpack.c.h.b16 %v1135
  %v1533 = vunpack.c.l.b16 %v1136
  %v1534 = vunpack.c.h.b16 %v1136
  %v1535 = vunpack.c.l.b16 %v1137
  %v1536 = vunpack.c.h.b16 %v1137
  %v1537 = vunpack.c.l.b16 %v1138
  %v1538 = vunpack.c.h.b16 %v1138
  %v1539 = vunpack.c.l.b16 %v1139
  %v1540 = vunpack.c.h.b16 %v1139
  %v1541 = vunpack.c.l.b16 %v1140
  %v1542 = vunpack.c.h.b16 %v1140
  %v1543 = vunpack.c.l.b16 %v1141
  %v1544 = vunpack.c.h.b16 %v1141
  %v1545 = vunpack.c.l.b16 %v1142
  %v1546 = vunpack.c.h.b16 %v1142
  %v1547 = vunpack.c.l.b16 %v1143
  %v1548 = vunpack.c.h.b16 %v1143
  %v1549 = vunpack.c.l.b16 %v1144
  %v1550 = vunpack.c.h.b16 %v1144
  %v1551 = vunpack.c.l.b16 %v1145
  %v1552 = vunpack.c.h.b16 %v1145
  %v1553 = vunpack.c.l.b16 %v1146
  %v1554 = vunpack.c.h.b16 %v1146
  %v1555 = vunpack.c.l.b16 %v1147
  %v1556 = vunpack.c.h.b16 %v1147
  %v1557 = vunpack.c.l.b16 %v1148
  %v1558 = vunpack.c.h.b16 %v1148
  %v1559 = vunpack.c.l.b16 %v1149
  %v1560 = vunpack.c.h.b16 %v1149
  %v1561 = vunpack.c.l.b16 %v1150
  %v1562 = vunpack.c.h.b16 %v1150
  %v1563 = vunpack.c.l.b16 %v1151
  %v1564 = vunpack.c.h.b16 %v1151
  %v1565 = vunpack.c.l.b16 %v1152
  %v1566 = vunpack.c.h.b16 %v1152
  %v1567 = vunpack.c.l.b16 %v1153
  %v1568 = vunpack.c.h.b16 %v1153
  %v1569 = vunpack.c.l.b16 %v1154
  %v1570 = vunpack.c.h.b16 %v1154
  %v1571 = vunpack.c.l.b16 %v1155
  %v1572 = vunpack.c.h.b16 %v1155
  %v1573 = vunpack.c.l.b16 %v1156
  %v1574 = vunpack.c.h.b16 %v1156
  %v1575 = vunpack.c.l.b16 %v1157
  %v1576 = vunpack.c.h.b16 %v1157
  %v1577 = vunpack.c.l.b16 %v1158
  %v1578 = vunpack.c.h.b16 %v1158
  %v1579 = vunpack.c.l.b16 %v1159
  %v1580 = vunpack.c.h.b16 %v1159
  %v1581 = vunpack.c.l.b16 %v1160
  %v1582 = vunpack.c.h.b16 %v1160
  %v1583 = vunpack.c.l.b16 %v1161
  %v1584 = vunpack.c.h.b16 %v1161
  %v1585 = vunpack.c.l.b16 %v1162
  %v1586 = vunpack.c.h.b16 %v1162
  %v1587 = vunpack.c.l.b16 %v1163
  %v1588 = vunpack.c.h.b16 %v1163
  %v1589 = vunpack.c.l.b16 %v1164
  %v1590 = vunpack.c.h.b16 %v1164
  %v1591 = vunpack.c.l.b16 %v1165
  %v1592 = vunpack.c.h.b16 %v1165
  %v1593 = vunpack.c.l.b16 %v1166
  %v1594 = vunpack.c.h.b16 %v1166
  %v1595 = vunpack.c.l.b16 %v1167
  %v1596 = vunpack.c.h.b16 %v1167
  %v1597 = vunpack.c.l.b16 %v1168
  %v1598 = vunpack.c.h.b16 %v1168
  %v1599 = vunpack.c.l.b16 %v1169
  %v1600 = vunpack.c.h.b16 %v1169
  %v1601 = vunpack.c.l.b16 %v1170
  %v1602 = vunpack.c.h.b16 %v1170
  %v1603 = vunpack.c.l.b16 %v1171
  %v1604 = vunpack.c.h.b16 %v1171
  %v1605 = vunpack.c.l.b16 %v1172
  %v1606 = vunpack.c.h.b16 %v1172
  %v1607 = vunpack.c.l.b16 %v1173
  %v1608 = vunpack.c.h.b16 %v1173
  %v1609 = vunpack.c.l.b16 %v1174
  %v1610 = vunpack.c.h.b16 %v1174
  %v1611 = vunpack.c.l.b16 %v1175
  %v1612 = vunpack.c.h.b16 %v1175
  %v1613 = vunpack.c.l.b16 %v1176
  %v1614 = vunpack.c.h.b16 %v1176
  %v1615 = vunpack.c.l.b16 %v1177
  %v1616 = vunpack.c.h.b16 %v1177
  %v1617 = vunpack.c.l.b16 %v1178
  %v1618 = vunpack.c.h.b16 %v1178
  %v1619 = vunpack.c.l.b16 %v1179
  %v1620 = vunpack.c.h.b16 %v1179
  %v1621 = vunpack.c.l.b16 %v1180
  %v1622 = vunpack.c.h.b16 %v1180
  %v1623 = vunpack.c.l.b16 %v1181
  %v1624 = vunpack.c.h.b16 %v1181
  %v1625 = vunpack.c.l.b16 %v1182
  %v1626 = vunpack.c.h.b16 %v1182
  %v1627 = vunpack.c.l.b16 %v1183
  %v1628 = vunpack.c.h.b16 %v1183
  %v1629 = vunpack.c.l.b16 %v1184
  %v1630 = vunpack.c.h.b16 %v1184
  %v1631 = vunpack.c.l.b16 %v1185
  %v1632 = vunpack.c.h.b16 %v1185
  %v1633 = vunpack.c.l.b16 %v1186
  %v1634 = vunpack.c.h.b16 %v1186
  %v1635 = vpack.c.b16 %v1477, %v1475
  %v1636 = vpack.c.b16 %v1478, %v1476
  %v1637 = vpack.c.b16 %v1481, %v1479
  %v1638 = vpack.c.b16 %v1482, %v1480
  %v1639 = vpack.c.b16 %v1485, %v1483
  %v1640 = vpack.c.b16 %v1486, %v1484
  %v1641 = vpack.c.b16 %v1489, %v1487
  %v1642 = vpack.c.b16 %v1490, %v1488
  %v1643 = vpack.c.b16 %v1493, %v1491
  %v1644 = vpack.c.b16 %v1494, %v1492
  %v1645 = vpack.c.b16 %v1497, %v1495
  %v1646 = vpack.c.b16 %v1498, %v1496
  %v1647 = vpack.c.b16 %v1501, %v1499
  %v1648 = vpack.c.b16 %v1502, %v1500
  %v1649 = vpack.c.b16 %v1505, %v1503
  %v1650 = vpack.c.b16 %v1506, %v1504
  %v1651 = vpack.c.b16 %v1509, %v1507
  %v1652 = vpack.c.b16 %v1510, %v1508
  %v1653 = vpack.c.b16 %v1513, %v1511
  %v1654 = vpack.c.b16 %v1514, %v1512
  %v1655 = vpack.c.b16 %v1517, %v1515
  %v1656 = vpack.c.b16 %v1518, %v1516
  %v1657 = vpack.c.b16 %v1521, %v1519
  %v1658 = vpack.c.b16 %v1522, %v1520
  %v1659 = vpack.c.b16 %v1525, %v1523
  %v1660 = vpack.c.b16 %v1526, %v1524
  %v1661 = vpack.c.b16 %v1529, %v1527
  %v1662 = vpack.c.b16 %v1530, %v1528
  %v1663 = vpack.c.b16 %v1533, %v1531
  %v1664 = vpack.c.b16 %v1534, %v1532
  %v1665 = vpack.c.b16 %v1537, %v1535
  %v1666 = vpack.c.b16 %v1538, %v1536
  %v1667 = vpack.c.b16 %v1541, %v1539
  %v1668 = vpack.c.b16 %v1542, %v1540
  %v1669 = vpack.c.b16 %v1545, %v1543
  %v1670 = vpack.c.b16 %v1546, %v1544
  %v1671 = vpack.c.b16 %v1549, %v1547
  %v1672 = vpack.c.b16 %v1550, %v1548
  %v1673 = vpack.c.b16 %v1553, %v1551
  %v1674 = vpack.c.b16 %v1554, %v1552
  %v1675 = vpack.c.b16 %v1557, %v1555
  %v1676 = vpack.c.b16 %v1558, %v1556
  %v1677 = vpack.c.b16 %v1561, %v1559
  %v1678 = vpack.c.b16 %v1562, %v1560
  %v1679 = vpack.c.b16 %v1565, %v1563
  %v1680 = vpack.c.b16 %v1566, %v1564
  %v1681 = vpack.c.b16 %v1569, %v1567
  %v1682 = vpack.c.b16 %v1570, %v1568
  %v1683 = vpack.c.b16 %v1573, %v1571
  %v1684 = vpack.c.b16 %v1574, %v1572
  %v1685 = vpack.c.b16 %v1577, %v1575
  %v1686 = vpack.c.b16 %v1578, %v1576
  %v1687 = vpack.c.b16 %v1581, %v1579
  %v1688 = vpack.c.b16 %v1582, %v1580
  %v1689 = vpack.c.b16 %v1585, %v1583
  %v1690 = vpack.c.b16 %v1586, %v1584
  %v1691 = vpack.c.b16 %v1589, %v1587
  %v1692 = vpack.c.b16 %v1590, %v1588
  %v1693 = vpack.c.b16 %v1593, %v1591
  %v1694 = vpack.c.b16 %v1594, %v1592
  %v1695 = vpack.c.b16 %v1597, %v1595
  %v1696 = vpack.c.b16 %v1598, %v1596
  %v1697 = vpack.c.b16 %v1601, %v1599
  %v1698 = vpack.c.b16 %v1602, %v1600
  %v1699 = vpack.c.b16 %v1605, %v1603
  %v1700 = vpack.c.b16 %v1606, %v1604
  %v1701 = vpack.c.b16 %v1609, %v1607
  %v1702 = vpack.c.b16 %v1610, %v1608
  %v1703 = vpack.c.b16 %v1613, %v1611
  %v1704 = vpack.c.b16 %v1614, %v1612
  %v1705 = vpack.c.b16 %v1617, %v1615
  %v1706 = vpack.c.b16 %v1618, %v1616
  %v1707 = vpack.c.b16 %v1621, %v1619
  %v1708 = vpack.c.b16 %v1622, %v1620
  %v1709 = vpack.c.b16 %v1625, %v1623
  %v1710 = vpack.c.b16 %v1626, %v1624
  %v1711 = vpack.c.b16 %v1629, %v1627
  %v1712 = vpack.c.b16 %v1630, %v1628
  %v1713 = vpack.c.b16 %v1633, %v1631
  %v1714 = vpack.c.b16 %v1634, %v1632
  %1795 = vmatprep.subr.bf16.mxu0 %v1650
  %1796 = vmatpush1.bf16.msra.mxu0 %v1649
  %1797 = vmatprep.subr.bf16.mxu0 %v1648
  %1798 = vmatpush1.bf16.msra.mxu0 %v1647
  %1799 = vmatprep.subr.bf16.mxu0 %v1646
  %1800 = vmatpush1.bf16.msra.mxu0 %v1645
  %1801 = vmatprep.subr.bf16.mxu0 %v1644
  %1802 = vmatpush1.bf16.msra.mxu0 %v1643
  %1803 = vmatprep.subr.bf16.mxu0 %v1642
  %1804 = vmatpush1.bf16.msra.mxu0 %v1641
  %1805 = vmatprep.subr.bf16.mxu0 %v1640
  %1806 = vmatpush1.bf16.msra.mxu0 %v1639
  %1807 = vmatprep.subr.bf16.mxu0 %v1638
  %1808 = vmatpush1.bf16.msra.mxu0 %v1637
  %1809 = vmatprep.subr.bf16.mxu0 %v1636
  %1810 = vmatpush1.bf16.msra.mxu0 %v1635
  %1811 = vmatprep.subr.bf16.mxu0 %v1666
  %1812 = vmatpush2.bf16.msra.mxu0 %v1665
  %1813 = vmatprep.subr.bf16.mxu0 %v1664
  %1814 = vmatpush2.bf16.msra.mxu0 %v1663
  %1815 = vmatprep.subr.bf16.mxu0 %v1662
  %1816 = vmatpush2.bf16.msra.mxu0 %v1661
  %1817 = vmatprep.subr.bf16.mxu0 %v1660
  %1818 = vmatpush2.bf16.msra.mxu0 %v1659
  %1819 = vmatprep.subr.bf16.mxu0 %v1658
  %1820 = vmatpush2.bf16.msra.mxu0 %v1657
  %1821 = vmatprep.subr.bf16.mxu0 %v1656
  %1822 = vmatpush2.bf16.msra.mxu0 %v1655
  %1823 = vmatprep.subr.bf16.mxu0 %v1654
  %1824 = vmatpush2.bf16.msra.mxu0 %v1653
  %1825 = vmatprep.subr.bf16.mxu0 %v1652
  %1826 = vmatpush2.bf16.msra.mxu0 %v1651
  %1827 = vmatprep.mubr.bf16.mxu0 %v1316
  %1828 = vmatmul.mubr.bf16.gmra.mxu0 %v1315
  %v1829 = vpop.f32.mrf.mxu0
  %v1830 = vadd.f32 0.0, %v1829
  %v1831 = vpop.f32.mrf.mxu0
  %v1832 = vadd.f32 0.0, %v1831
  %v1833 = vpop.f32.mrf.mxu0
  %v1834 = vadd.f32 0.0, %v1833
  %v1835 = vpop.f32.mrf.mxu0
  %v1836 = vadd.f32 0.0, %v1835
  %1837 = vmatprep.mubr.bf16.mxu0 %v1321
  %1838 = vmatmul.mubr.bf16.gmra.mxu0 %v1320
  %v1839 = vpop.f32.mrf.mxu0
  %v1840 = vadd.f32 0.0, %v1839
  %v1841 = vpop.f32.mrf.mxu0
  %v1842 = vadd.f32 0.0, %v1841
  %v1843 = vpop.f32.mrf.mxu0
  %v1844 = vadd.f32 0.0, %v1843
  %v1845 = vpop.f32.mrf.mxu0
  %v1846 = vadd.f32 0.0, %v1845
  %1847 = vmatprep.mubr.bf16.mxu0 %v1326
  %1848 = vmatmul.mubr.bf16.gmra.mxu0 %v1325
  %v1849 = vpop.f32.mrf.mxu0
  %v1850 = vadd.f32 0.0, %v1849
  %v1851 = vpop.f32.mrf.mxu0
  %v1852 = vadd.f32 0.0, %v1851
  %v1853 = vpop.f32.mrf.mxu0
  %v1854 = vadd.f32 0.0, %v1853
  %v1855 = vpop.f32.mrf.mxu0
  %v1856 = vadd.f32 0.0, %v1855
  %1857 = vmatprep.mubr.bf16.mxu0 %v1331
  %1858 = vmatmul.mubr.bf16.gmra.mxu0 %v1330
  %v1859 = vpop.f32.mrf.mxu0
  %v1860 = vadd.f32 0.0, %v1859
  %v1861 = vpop.f32.mrf.mxu0
  %v1862 = vadd.f32 0.0, %v1861
  %v1863 = vpop.f32.mrf.mxu0
  %v1864 = vadd.f32 0.0, %v1863
  %v1865 = vpop.f32.mrf.mxu0
  %v1866 = vadd.f32 0.0, %v1865
  %1867 = vmatprep.mubr.bf16.mxu0 %v1336
  %1868 = vmatmul.mubr.bf16.gmra.mxu0 %v1335
  %v1869 = vpop.f32.mrf.mxu0
  %v1870 = vadd.f32 0.0, %v1869
  %v1871 = vpop.f32.mrf.mxu0
  %v1872 = vadd.f32 0.0, %v1871
  %v1873 = vpop.f32.mrf.mxu0
  %v1874 = vadd.f32 0.0, %v1873
  %v1875 = vpop.f32.mrf.mxu0
  %v1876 = vadd.f32 0.0, %v1875
  %1877 = vmatprep.mubr.bf16.mxu0 %v1341
  %1878 = vmatmul.mubr.bf16.gmra.mxu0 %v1340
  %v1879 = vpop.f32.mrf.mxu0
  %v1880 = vadd.f32 0.0, %v1879
  %v1881 = vpop.f32.mrf.mxu0
  %v1882 = vadd.f32 0.0, %v1881
  %v1883 = vpop.f32.mrf.mxu0
  %v1884 = vadd.f32 0.0, %v1883
  %v1885 = vpop.f32.mrf.mxu0
  %v1886 = vadd.f32 0.0, %v1885
  %1887 = vmatprep.mubr.bf16.mxu0 %v1346
  %1888 = vmatmul.mubr.bf16.gmra.mxu0 %v1345
  %v1889 = vpop.f32.mrf.mxu0
  %v1890 = vadd.f32 0.0, %v1889
  %v1891 = vpop.f32.mrf.mxu0
  %v1892 = vadd.f32 0.0, %v1891
  %v1893 = vpop.f32.mrf.mxu0
  %v1894 = vadd.f32 0.0, %v1893
  %v1895 = vpop.f32.mrf.mxu0
  %v1896 = vadd.f32 0.0, %v1895
  %1897 = vmatprep.mubr.bf16.mxu0 %v1351
  %1898 = vmatmul.mubr.bf16.gmra.mxu0 %v1350
  %v1899 = vpop.f32.mrf.mxu0
  %v1900 = vadd.f32 0.0, %v1899
  %v1901 = vpop.f32.mrf.mxu0
  %v1902 = vadd.f32 0.0, %v1901
  %v1903 = vpop.f32.mrf.mxu0
  %v1904 = vadd.f32 0.0, %v1903
  %v1905 = vpop.f32.mrf.mxu0
  %v1906 = vadd.f32 0.0, %v1905
  %1907 = vdwg.mxu0
  %1908 = vmatprep.subr.bf16.mxu0 %v1682
  %1909 = vmatpush1.bf16.msra.mxu0 %v1681
  %1910 = vmatprep.subr.bf16.mxu0 %v1680
  %1911 = vmatpush1.bf16.msra.mxu0 %v1679
  %1912 = vmatprep.subr.bf16.mxu0 %v1678
  %1913 = vmatpush1.bf16.msra.mxu0 %v1677
  %1914 = vmatprep.subr.bf16.mxu0 %v1676
  %1915 = vmatpush1.bf16.msra.mxu0 %v1675
  %1916 = vmatprep.subr.bf16.mxu0 %v1674
  %1917 = vmatpush1.bf16.msra.mxu0 %v1673
  %1918 = vmatprep.subr.bf16.mxu0 %v1672
  %1919 = vmatpush1.bf16.msra.mxu0 %v1671
  %1920 = vmatprep.subr.bf16.mxu0 %v1670
  %1921 = vmatpush1.bf16.msra.mxu0 %v1669
  %1922 = vmatprep.subr.bf16.mxu0 %v1668
  %1923 = vmatpush1.bf16.msra.mxu0 %v1667
  %1924 = vmatprep.subr.bf16.mxu0 %v1698
  %1925 = vmatpush2.bf16.msra.mxu0 %v1697
  %1926 = vmatprep.subr.bf16.mxu0 %v1696
  %1927 = vmatpush2.bf16.msra.mxu0 %v1695
  %1928 = vmatprep.subr.bf16.mxu0 %v1694
  %1929 = vmatpush2.bf16.msra.mxu0 %v1693
  %1930 = vmatprep.subr.bf16.mxu0 %v1692
  %1931 = vmatpush2.bf16.msra.mxu0 %v1691
  %1932 = vmatprep.subr.bf16.mxu0 %v1690
  %1933 = vmatpush2.bf16.msra.mxu0 %v1689
  %1934 = vmatprep.subr.bf16.mxu0 %v1688
  %1935 = vmatpush2.bf16.msra.mxu0 %v1687
  %1936 = vmatprep.subr.bf16.mxu0 %v1686
  %1937 = vmatpush2.bf16.msra.mxu0 %v1685
  %1938 = vmatprep.subr.bf16.mxu0 %v1684
  %1939 = vmatpush2.bf16.msra.mxu0 %v1683
  %1940 = vmatprep.mubr.bf16.mxu0 %v1318
  %1941 = vmatmul.mubr.bf16.gmra.mxu0 %v1317
  %v1942 = vpop.f32.mrf.mxu0
  %v1943 = vadd.f32 %v1830, %v1942
  %v1944 = vpop.f32.mrf.mxu0
  %v1945 = vadd.f32 %v1832, %v1944
  %v1946 = vpop.f32.mrf.mxu0
  %v1947 = vadd.f32 %v1834, %v1946
  %v1948 = vpop.f32.mrf.mxu0
  %v1949 = vadd.f32 %v1836, %v1948
  %1950 = vmatprep.mubr.bf16.mxu0 %v1323
  %1951 = vmatmul.mubr.bf16.gmra.mxu0 %v1322
  %v1952 = vpop.f32.mrf.mxu0
  %v1953 = vadd.f32 %v1840, %v1952
  %v1954 = vpop.f32.mrf.mxu0
  %v1955 = vadd.f32 %v1842, %v1954
  %v1956 = vpop.f32.mrf.mxu0
  %v1957 = vadd.f32 %v1844, %v1956
  %v1958 = vpop.f32.mrf.mxu0
  %v1959 = vadd.f32 %v1846, %v1958
  %1960 = vmatprep.mubr.bf16.mxu0 %v1328
  %1961 = vmatmul.mubr.bf16.gmra.mxu0 %v1327
  %v1962 = vpop.f32.mrf.mxu0
  %v1963 = vadd.f32 %v1850, %v1962
  %v1964 = vpop.f32.mrf.mxu0
  %v1965 = vadd.f32 %v1852, %v1964
  %v1966 = vpop.f32.mrf.mxu0
  %v1967 = vadd.f32 %v1854, %v1966
  %v1968 = vpop.f32.mrf.mxu0
  %v1969 = vadd.f32 %v1856, %v1968
  %1970 = vmatprep.mubr.bf16.mxu0 %v1333
  %1971 = vmatmul.mubr.bf16.gmra.mxu0 %v1332
  %v1972 = vpop.f32.mrf.mxu0
  %v1973 = vadd.f32 %v1860, %v1972
  %v1974 = vpop.f32.mrf.mxu0
  %v1975 = vadd.f32 %v1862, %v1974
  %v1976 = vpop.f32.mrf.mxu0
  %v1977 = vadd.f32 %v1864, %v1976
  %v1978 = vpop.f32.mrf.mxu0
  %v1979 = vadd.f32 %v1866, %v1978
  %1980 = vmatprep.mubr.bf16.mxu0 %v1338
  %1981 = vmatmul.mubr.bf16.gmra.mxu0 %v1337
  %v1982 = vpop.f32.mrf.mxu0
  %v1983 = vadd.f32 %v1870, %v1982
  %v1984 = vpop.f32.mrf.mxu0
  %v1985 = vadd.f32 %v1872, %v1984
  %v1986 = vpop.f32.mrf.mxu0
  %v1987 = vadd.f32 %v1874, %v1986
  %v1988 = vpop.f32.mrf.mxu0
  %v1989 = vadd.f32 %v1876, %v1988
  %1990 = vmatprep.mubr.bf16.mxu0 %v1343
  %1991 = vmatmul.mubr.bf16.gmra.mxu0 %v1342
  %v1992 = vpop.f32.mrf.mxu0
  %v1993 = vadd.f32 %v1880, %v1992
  %v1994 = vpop.f32.mrf.mxu0
  %v1995 = vadd.f32 %v1882, %v1994
  %v1996 = vpop.f32.mrf.mxu0
  %v1997 = vadd.f32 %v1884, %v1996
  %v1998 = vpop.f32.mrf.mxu0
  %v1999 = vadd.f32 %v1886, %v1998
  %2000 = vmatprep.mubr.bf16.mxu0 %v1348
  %2001 = vmatmul.mubr.bf16.gmra.mxu0 %v1347
  %v2002 = vpop.f32.mrf.mxu0
  %v2003 = vadd.f32 %v1890, %v2002
  %v2004 = vpop.f32.mrf.mxu0
  %v2005 = vadd.f32 %v1892, %v2004
  %v2006 = vpop.f32.mrf.mxu0
  %v2007 = vadd.f32 %v1894, %v2006
  %v2008 = vpop.f32.mrf.mxu0
  %v2009 = vadd.f32 %v1896, %v2008
  %2010 = vmatprep.mubr.bf16.mxu0 %v1353
  %2011 = vmatmul.mubr.bf16.gmra.mxu0 %v1352
  %v2012 = vpop.f32.mrf.mxu0
  %v2013 = vadd.f32 %v1900, %v2012
  %v2014 = vpop.f32.mrf.mxu0
  %v2015 = vadd.f32 %v1902, %v2014
  %v2016 = vpop.f32.mrf.mxu0
  %v2017 = vadd.f32 %v1904, %v2016
  %v2018 = vpop.f32.mrf.mxu0
  %v2019 = vadd.f32 %v1906, %v2018
  %2020 = vdwg.mxu0
  %2021 = vmatprep.subr.bf16.mxu0 %v1714
  %2022 = vmatpush1.bf16.msra.mxu0 %v1713
  %2023 = vmatprep.subr.bf16.mxu0 %v1712
  %2024 = vmatpush1.bf16.msra.mxu0 %v1711
  %2025 = vmatprep.subr.bf16.mxu0 %v1710
  %2026 = vmatpush1.bf16.msra.mxu0 %v1709
  %2027 = vmatprep.subr.bf16.mxu0 %v1708
  %2028 = vmatpush1.bf16.msra.mxu0 %v1707
  %2029 = vmatprep.subr.bf16.mxu0 %v1706
  %2030 = vmatpush1.bf16.msra.mxu0 %v1705
  %2031 = vmatprep.subr.bf16.mxu0 %v1704
  %2032 = vmatpush1.bf16.msra.mxu0 %v1703
  %2033 = vmatprep.subr.bf16.mxu0 %v1702
  %2034 = vmatpush1.bf16.msra.mxu0 %v1701
  %2035 = vmatprep.subr.bf16.mxu0 %v1700
  %2036 = vmatpush1.bf16.msra.mxu0 %v1699
  %2037 = vmatprep.subr.bf16.mxu0 0
  %2038 = vmatpush2.bf16.msra.mxu0 0
  %2039 = vmatprep.subr.bf16.mxu0 0
  %2040 = vmatpush2.bf16.msra.mxu0 0
  %2041 = vmatprep.subr.bf16.mxu0 0
  %2042 = vmatpush2.bf16.msra.mxu0 0
  %2043 = vmatprep.subr.bf16.mxu0 0
  %2044 = vmatpush2.bf16.msra.mxu0 0
  %2045 = vmatprep.subr.bf16.mxu0 0
  %2046 = vmatpush2.bf16.msra.mxu0 0
  %2047 = vmatprep.subr.bf16.mxu0 0
  %2048 = vmatpush2.bf16.msra.mxu0 0
  %2049 = vmatprep.subr.bf16.mxu0 0
  %2050 = vmatpush2.bf16.msra.mxu0 0
  %2051 = vmatprep.subr.bf16.mxu0 0
  %2052 = vmatpush2.bf16.msra.mxu0 0
  %2053 = vmatprep.mubr.bf16.mxu0 0
  %2054 = vmatmul.mubr.bf16.gmra.mxu0 %v1319
  %v2055 = vpop.f32.mrf.mxu0
  %v2056 = vadd.f32 %v1943, %v2055
  %v2057 = vpop.f32.mrf.mxu0
  %v2058 = vadd.f32 %v1945, %v2057
  %v2059 = vpop.f32.mrf.mxu0
  %v2060 = vadd.f32 %v1947, %v2059
  %v2061 = vpop.f32.mrf.mxu0
  %v2062 = vadd.f32 %v1949, %v2061
  %2063 = vmatprep.mubr.bf16.mxu0 0
  %2064 = vmatmul.mubr.bf16.gmra.mxu0 %v1324
  %v2065 = vpop.f32.mrf.mxu0
  %v2066 = vadd.f32 %v1953, %v2065
  %v2067 = vpop.f32.mrf.mxu0
  %v2068 = vadd.f32 %v1955, %v2067
  %v2069 = vpop.f32.mrf.mxu0
  %v2070 = vadd.f32 %v1957, %v2069
  %v2071 = vpop.f32.mrf.mxu0
  %v2072 = vadd.f32 %v1959, %v2071
  %2073 = vmatprep.mubr.bf16.mxu0 0
  %2074 = vmatmul.mubr.bf16.gmra.mxu0 %v1329
  %v2075 = vpop.f32.mrf.mxu0
  %v2076 = vadd.f32 %v1963, %v2075
  %v2077 = vpop.f32.mrf.mxu0
  %v2078 = vadd.f32 %v1965, %v2077
  %v2079 = vpop.f32.mrf.mxu0
  %v2080 = vadd.f32 %v1967, %v2079
  %v2081 = vpop.f32.mrf.mxu0
  %v2082 = vadd.f32 %v1969, %v2081
  %2083 = vmatprep.mubr.bf16.mxu0 0
  %2084 = vmatmul.mubr.bf16.gmra.mxu0 %v1334
  %v2085 = vpop.f32.mrf.mxu0
  %v2086 = vadd.f32 %v1973, %v2085
  %v2087 = vpop.f32.mrf.mxu0
  %v2088 = vadd.f32 %v1975, %v2087
  %v2089 = vpop.f32.mrf.mxu0
  %v2090 = vadd.f32 %v1977, %v2089
  %v2091 = vpop.f32.mrf.mxu0
  %v2092 = vadd.f32 %v1979, %v2091
  %2093 = vmatprep.mubr.bf16.mxu0 0
  %2094 = vmatmul.mubr.bf16.gmra.mxu0 %v1339
  %v2095 = vpop.f32.mrf.mxu0
  %v2096 = vadd.f32 %v1983, %v2095
  %v2097 = vpop.f32.mrf.mxu0
  %v2098 = vadd.f32 %v1985, %v2097
  %v2099 = vpop.f32.mrf.mxu0
  %v2100 = vadd.f32 %v1987, %v2099
  %v2101 = vpop.f32.mrf.mxu0
  %v2102 = vadd.f32 %v1989, %v2101
  %2103 = vmatprep.mubr.bf16.mxu0 0
  %2104 = vmatmul.mubr.bf16.gmra.mxu0 %v1344
  %v2105 = vpop.f32.mrf.mxu0
  %v2106 = vadd.f32 %v1993, %v2105
  %v2107 = vpop.f32.mrf.mxu0
  %v2108 = vadd.f32 %v1995, %v2107
  %v2109 = vpop.f32.mrf.mxu0
  %v2110 = vadd.f32 %v1997, %v2109
  %v2111 = vpop.f32.mrf.mxu0
  %v2112 = vadd.f32 %v1999, %v2111
  %2113 = vmatprep.mubr.bf16.mxu0 0
  %2114 = vmatmul.mubr.bf16.gmra.mxu0 %v1349
  %v2115 = vpop.f32.mrf.mxu0
  %v2116 = vadd.f32 %v2003, %v2115
  %v2117 = vpop.f32.mrf.mxu0
  %v2118 = vadd.f32 %v2005, %v2117
  %v2119 = vpop.f32.mrf.mxu0
  %v2120 = vadd.f32 %v2007, %v2119
  %v2121 = vpop.f32.mrf.mxu0
  %v2122 = vadd.f32 %v2009, %v2121
  %2123 = vmatprep.mubr.bf16.mxu0 0
  %2124 = vmatmul.mubr.bf16.gmra.mxu0 %v1354
  %v2125 = vpop.f32.mrf.mxu0
  %v2126 = vadd.f32 %v2013, %v2125
  %v2127 = vpop.f32.mrf.mxu0
  %v2128 = vadd.f32 %v2015, %v2127
  %v2129 = vpop.f32.mrf.mxu0
  %v2130 = vadd.f32 %v2017, %v2129
  %v2131 = vpop.f32.mrf.mxu0
  %v2132 = vadd.f32 %v2019, %v2131
  %2133 = vdwg.mxu0
  %v2134 = vld [vmem:[%s4] sm:$0x1]
  %v2136 = vlaneseq
  %v2137 = vshrl.u32 %v2136, 7
  %v2138 = vsub.s32 0, %v2137
  %v2139 = vrot.slane %v2134, %v2138
  %v2141 = vmax.f32 %v2056, %v2066
  %v2142 = vmax.f32 %v2058, %v2068
  %v2143 = vmax.f32 %v2060, %v2070
  %v2144 = vmax.f32 %v2062, %v2072
  %v2145 = vmax.f32 %v2141, %v2142
  %v2146 = vmax.f32 %v2143, %v2144
  %v2147 = vadd.f32 %v2145, %v2139
  %v2148 = vadd.f32 %v2146, %v2139
  %v2149 = vmax.f32 %v2147, 0.0
  %v2150 = vmax.f32 %v2148, 0.0
  %v2151 = vpack.c.bf16 %v2150, %v2149
  %v2152 = vmax.f32 %v2076, %v2086
  %v2153 = vmax.f32 %v2078, %v2088
  %v2154 = vmax.f32 %v2080, %v2090
  %v2155 = vmax.f32 %v2082, %v2092
  %v2156 = vmax.f32 %v2152, %v2153
  %v2157 = vmax.f32 %v2154, %v2155
  %v2158 = vadd.f32 %v2156, %v2139
  %v2159 = vadd.f32 %v2157, %v2139
  %v2160 = vmax.f32 %v2158, 0.0
  %v2161 = vmax.f32 %v2159, 0.0
  %v2162 = vpack.c.bf16 %v2161, %v2160
  %v2163 = vmax.f32 %v2096, %v2106
  %v2164 = vmax.f32 %v2098, %v2108
  %v2165 = vmax.f32 %v2100, %v2110
  %v2166 = vmax.f32 %v2102, %v2112
  %v2167 = vmax.f32 %v2163, %v2164
  %v2168 = vmax.f32 %v2165, %v2166
  %v2169 = vadd.f32 %v2167, %v2139
  %v2170 = vadd.f32 %v2168, %v2139
  %v2171 = vmax.f32 %v2169, 0.0
  %v2172 = vmax.f32 %v2170, 0.0
  %v2173 = vpack.c.bf16 %v2172, %v2171
  %v2174 = vmax.f32 %v2116, %v2126
  %v2175 = vmax.f32 %v2118, %v2128
  %v2176 = vmax.f32 %v2120, %v2130
  %v2177 = vmax.f32 %v2122, %v2132
  %v2178 = vmax.f32 %v2174, %v2175
  %v2179 = vmax.f32 %v2176, %v2177
  %v2180 = vadd.f32 %v2178, %v2139
  %v2181 = vadd.f32 %v2179, %v2139
  %v2182 = vmax.f32 %v2180, 0.0
  %v2183 = vmax.f32 %v2181, 0.0
  %v2184 = vpack.c.bf16 %v2183, %v2182
  %v2185 = vld [vmem:[%s5] sm:$0xf]
  %v2186 = vld [vmem:[%s5 + $0x4] sm:$0xf]
  %v2187 = vld [vmem:[%s5 + $0x8] sm:$0xf]
  %v2188 = vld [vmem:[%s5 + $0xc] sm:$0xf]
  %v2189 = vld [vmem:[%s5 + $0x10] sm:$0xf]
  %v2190 = vld [vmem:[%s5 + $0x14] sm:$0xf]
  %v2191 = vld [vmem:[%s5 + $0x18] sm:$0xf]
  %v2192 = vld [vmem:[%s5 + $0x1c] sm:$0xf]
  %v2193 = vld [vmem:[%s5 + $0x20] sm:$0xf]
  %v2194 = vld [vmem:[%s5 + $0x24] sm:$0xf]
  %v2195 = vld [vmem:[%s5 + $0x28] sm:$0xf]
  %v2196 = vld [vmem:[%s5 + $0x2c] sm:$0xf]
  %v2197 = vld [vmem:[%s5 + $0x30] sm:$0xf]
  %v2198 = vld [vmem:[%s5 + $0x34] sm:$0xf]
  %v2199 = vld [vmem:[%s5 + $0x38] sm:$0xf]
  %v2200 = vld [vmem:[%s5 + $0x3c] sm:$0xf]
  %v2201 = vld [vmem:[%s5 + $0x40] sm:$0xf]
  %v2202 = vld [vmem:[%s5 + $0x44] sm:$0xf]
  %v2203 = vld [vmem:[%s5 + $0x48] sm:$0xf]
  %v2204 = vld [vmem:[%s5 + $0x4c] sm:$0xf]
  %v2205 = vld [vmem:[%s5 + $0x50] sm:$0xf]
  %v2206 = vld [vmem:[%s5 + $0x54] sm:$0xf]
  %v2207 = vld [vmem:[%s5 + $0x58] sm:$0xf]
  %v2208 = vld [vmem:[%s5 + $0x5c] sm:$0xf]
  %v2209 = vld [vmem:[%s5 + $0x60] sm:$0xf]
  %v2210 = vld [vmem:[%s5 + $0x64] sm:$0xf]
  %v2211 = vld [vmem:[%s5 + $0x68] sm:$0xf]
  %v2212 = vld [vmem:[%s5 + $0x6c] sm:$0xf]
  %v2213 = vld [vmem:[%s5 + $0x70] sm:$0xf]
  %v2214 = vld [vmem:[%s5 + $0x74] sm:$0xf]
  %v2215 = vld [vmem:[%s5 + $0x78] sm:$0xf]
  %v2216 = vld [vmem:[%s5 + $0x7c] sm:$0xf]
  %v2217 = vld [vmem:[%s5 + $0x80] sm:$0xf]
  %v2218 = vld [vmem:[%s5 + $0x84] sm:$0xf]
  %v2219 = vld [vmem:[%s5 + $0x88] sm:$0xf]
  %v2220 = vld [vmem:[%s5 + $0x8c] sm:$0xf]
  %v2221 = vld [vmem:[%s5 + $0x90] sm:$0xf]
  %v2222 = vld [vmem:[%s5 + $0x94] sm:$0xf]
  %v2223 = vld [vmem:[%s5 + $0x98] sm:$0xf]
  %v2224 = vld [vmem:[%s5 + $0x9c] sm:$0xf]
  %v2225 = vld [vmem:[%s5 + $0xa0] sm:$0xf]
  %v2226 = vld [vmem:[%s5 + $0xa4] sm:$0xf]
  %v2227 = vld [vmem:[%s5 + $0xa8] sm:$0xf]
  %v2228 = vld [vmem:[%s5 + $0xac] sm:$0xf]
  %v2229 = vld [vmem:[%s5 + $0xb0] sm:$0xf]
  %v2230 = vld [vmem:[%s5 + $0xb4] sm:$0xf]
  %v2231 = vld [vmem:[%s5 + $0xb8] sm:$0xf]
  %v2232 = vld [vmem:[%s5 + $0xbc] sm:$0xf]
  %v2233 = vld [vmem:[%s5 + $0xc0] sm:$0xf]
  %v2234 = vld [vmem:[%s5 + $0xc4] sm:$0xf]
  %v2235 = vld [vmem:[%s5 + $0xc8] sm:$0xf]
  %v2236 = vld [vmem:[%s5 + $0xcc] sm:$0xf]
  %v2237 = vld [vmem:[%s5 + $0xd0] sm:$0xf]
  %v2238 = vld [vmem:[%s5 + $0xd4] sm:$0xf]
  %v2239 = vld [vmem:[%s5 + $0xd8] sm:$0xf]
  %v2240 = vld [vmem:[%s5 + $0xdc] sm:$0xf]
  %v2241 = vld [vmem:[%s5 + $0xe0] sm:$0xf]
  %v2242 = vld [vmem:[%s5 + $0xe4] sm:$0xf]
  %v2243 = vld [vmem:[%s5 + $0xe8] sm:$0xf]
  %v2244 = vld [vmem:[%s5 + $0xec] sm:$0xf]
  %v2245 = vld [vmem:[%s5 + $0xf0] sm:$0xf]
  %v2246 = vld [vmem:[%s5 + $0xf4] sm:$0xf]
  %v2247 = vld [vmem:[%s5 + $0xf8] sm:$0xf]
  %v2248 = vld [vmem:[%s5 + $0xfc] sm:$0xf]
  %v2249 = vld [vmem:[%s6] sm:$0x1]
  %v2251 = vlaneseq
  %v2252 = vshrl.u32 %v2251, 7
  %v2253 = vsub.s32 0, %v2252
  %v2254 = vrot.slane %v2249, %v2253
  %v2320 = vunpack.c.l.b16 %v2185
  %v2321 = vunpack.c.l.b16 %v2186
  %v2322 = vunpack.c.l.b16 %v2187
  %v2323 = vunpack.c.l.b16 %v2188
  %v2324 = vunpack.c.l.b16 %v2189
  %v2325 = vunpack.c.l.b16 %v2190
  %v2326 = vunpack.c.l.b16 %v2191
  %v2327 = vunpack.c.l.b16 %v2192
  %v2328 = vunpack.c.l.b16 %v2193
  %v2329 = vunpack.c.l.b16 %v2194
  %v2330 = vunpack.c.l.b16 %v2195
  %v2331 = vunpack.c.l.b16 %v2196
  %v2332 = vunpack.c.l.b16 %v2197
  %v2333 = vunpack.c.l.b16 %v2198
  %v2334 = vunpack.c.l.b16 %v2199
  %v2335 = vunpack.c.l.b16 %v2200
  %v2336 = vunpack.c.l.b16 %v2201
  %v2337 = vunpack.c.l.b16 %v2202
  %v2338 = vunpack.c.l.b16 %v2203
  %v2339 = vunpack.c.l.b16 %v2204
  %v2340 = vunpack.c.l.b16 %v2205
  %v2341 = vunpack.c.l.b16 %v2206
  %v2342 = vunpack.c.l.b16 %v2207
  %v2343 = vunpack.c.l.b16 %v2208
  %v2344 = vunpack.c.l.b16 %v2209
  %v2345 = vunpack.c.l.b16 %v2210
  %v2346 = vunpack.c.l.b16 %v2211
  %v2347 = vunpack.c.l.b16 %v2212
  %v2348 = vunpack.c.l.b16 %v2213
  %v2349 = vunpack.c.l.b16 %v2214
  %v2350 = vunpack.c.l.b16 %v2215
  %v2351 = vunpack.c.l.b16 %v2216
  %v2352 = vunpack.c.l.b16 %v2217
  %v2353 = vunpack.c.l.b16 %v2218
  %v2354 = vunpack.c.l.b16 %v2219
  %v2355 = vunpack.c.l.b16 %v2220
  %v2356 = vunpack.c.l.b16 %v2221
  %v2357 = vunpack.c.l.b16 %v2222
  %v2358 = vunpack.c.l.b16 %v2223
  %v2359 = vunpack.c.l.b16 %v2224
  %v2360 = vunpack.c.l.b16 %v2225
  %v2361 = vunpack.c.l.b16 %v2226
  %v2362 = vunpack.c.l.b16 %v2227
  %v2363 = vunpack.c.l.b16 %v2228
  %v2364 = vunpack.c.l.b16 %v2229
  %v2365 = vunpack.c.l.b16 %v2230
  %v2366 = vunpack.c.l.b16 %v2231
  %v2367 = vunpack.c.l.b16 %v2232
  %v2368 = vunpack.c.l.b16 %v2233
  %v2369 = vunpack.c.l.b16 %v2234
  %v2370 = vunpack.c.l.b16 %v2235
  %v2371 = vunpack.c.l.b16 %v2236
  %v2372 = vunpack.c.l.b16 %v2237
  %v2373 = vunpack.c.l.b16 %v2238
  %v2374 = vunpack.c.l.b16 %v2239
  %v2375 = vunpack.c.l.b16 %v2240
  %v2376 = vunpack.c.l.b16 %v2241
  %v2377 = vunpack.c.l.b16 %v2242
  %v2378 = vunpack.c.l.b16 %v2243
  %v2379 = vunpack.c.l.b16 %v2244
  %v2380 = vunpack.c.l.b16 %v2245
  %v2381 = vunpack.c.l.b16 %v2246
  %v2382 = vunpack.c.l.b16 %v2247
  %v2383 = vunpack.c.l.b16 %v2248
  %v2384 = vpack.c.b16 %v2321, %v2320
  %v2385 = vpack.c.b16 %v2323, %v2322
  %v2386 = vpack.c.b16 %v2325, %v2324
  %v2387 = vpack.c.b16 %v2327, %v2326
  %v2388 = vpack.c.b16 %v2329, %v2328
  %v2389 = vpack.c.b16 %v2331, %v2330
  %v2390 = vpack.c.b16 %v2333, %v2332
  %v2391 = vpack.c.b16 %v2335, %v2334
  %v2392 = vpack.c.b16 %v2337, %v2336
  %v2393 = vpack.c.b16 %v2339, %v2338
  %v2394 = vpack.c.b16 %v2341, %v2340
  %v2395 = vpack.c.b16 %v2343, %v2342
  %v2396 = vpack.c.b16 %v2345, %v2344
  %v2397 = vpack.c.b16 %v2347, %v2346
  %v2398 = vpack.c.b16 %v2349, %v2348
  %v2399 = vpack.c.b16 %v2351, %v2350
  %v2400 = vpack.c.b16 %v2353, %v2352
  %v2401 = vpack.c.b16 %v2355, %v2354
  %v2402 = vpack.c.b16 %v2357, %v2356
  %v2403 = vpack.c.b16 %v2359, %v2358
  %v2404 = vpack.c.b16 %v2361, %v2360
  %v2405 = vpack.c.b16 %v2363, %v2362
  %v2406 = vpack.c.b16 %v2365, %v2364
  %v2407 = vpack.c.b16 %v2367, %v2366
  %v2408 = vpack.c.b16 %v2369, %v2368
  %v2409 = vpack.c.b16 %v2371, %v2370
  %v2410 = vpack.c.b16 %v2373, %v2372
  %v2411 = vpack.c.b16 %v2375, %v2374
  %v2412 = vpack.c.b16 %v2377, %v2376
  %v2413 = vpack.c.b16 %v2379, %v2378
  %v2414 = vpack.c.b16 %v2381, %v2380
  %v2415 = vpack.c.b16 %v2383, %v2382
  %2448 = vmatprep.subr.bf16.mxu0 0
  %2449 = vmatpush1.bf16.msra.mxu0 %v2391
  %2450 = vmatprep.subr.bf16.mxu0 0
  %2451 = vmatpush1.bf16.msra.mxu0 %v2390
  %2452 = vmatprep.subr.bf16.mxu0 0
  %2453 = vmatpush1.bf16.msra.mxu0 %v2389
  %2454 = vmatprep.subr.bf16.mxu0 0
  %2455 = vmatpush1.bf16.msra.mxu0 %v2388
  %2456 = vmatprep.subr.bf16.mxu0 0
  %2457 = vmatpush1.bf16.msra.mxu0 %v2387
  %2458 = vmatprep.subr.bf16.mxu0 0
  %2459 = vmatpush1.bf16.msra.mxu0 %v2386
  %2460 = vmatprep.subr.bf16.mxu0 0
  %2461 = vmatpush1.bf16.msra.mxu0 %v2385
  %2462 = vmatprep.subr.bf16.mxu0 0
  %2463 = vmatpush1.bf16.msra.mxu0 %v2384
  %2464 = vmatprep.subr.bf16.mxu0 0
  %2465 = vmatpush2.bf16.msra.mxu0 %v2399
  %2466 = vmatprep.subr.bf16.mxu0 0
  %2467 = vmatpush2.bf16.msra.mxu0 %v2398
  %2468 = vmatprep.subr.bf16.mxu0 0
  %2469 = vmatpush2.bf16.msra.mxu0 %v2397
  %2470 = vmatprep.subr.bf16.mxu0 0
  %2471 = vmatpush2.bf16.msra.mxu0 %v2396
  %2472 = vmatprep.subr.bf16.mxu0 0
  %2473 = vmatpush2.bf16.msra.mxu0 %v2395
  %2474 = vmatprep.subr.bf16.mxu0 0
  %2475 = vmatpush2.bf16.msra.mxu0 %v2394
  %2476 = vmatprep.subr.bf16.mxu0 0
  %2477 = vmatpush2.bf16.msra.mxu0 %v2393
  %2478 = vmatprep.subr.bf16.mxu0 0
  %2479 = vmatpush2.bf16.msra.mxu0 %v2392
  %2480 = vmatprep.mubr.bf16.mxu0 %v2162
  %2481 = vmatmul.mubr.bf16.gmra.mxu0 %v2151
  %v2482 = vpop.f32.mrf.mxu0
  %v2483 = vadd.f32 %v2254, %v2482
  %v2484 = vpop.f32.mrf.mxu0
  %v2485 = vpop.f32.mrf.mxu0
  %v2486 = vadd.f32 %v2254, %v2485
  %v2487 = vpop.f32.mrf.mxu0
  %2488 = vdwg.mxu0
  %2489 = vmatprep.subr.bf16.mxu0 0
  %2490 = vmatpush1.bf16.msra.mxu0 %v2407
  %2491 = vmatprep.subr.bf16.mxu0 0
  %2492 = vmatpush1.bf16.msra.mxu0 %v2406
  %2493 = vmatprep.subr.bf16.mxu0 0
  %2494 = vmatpush1.bf16.msra.mxu0 %v2405
  %2495 = vmatprep.subr.bf16.mxu0 0
  %2496 = vmatpush1.bf16.msra.mxu0 %v2404
  %2497 = vmatprep.subr.bf16.mxu0 0
  %2498 = vmatpush1.bf16.msra.mxu0 %v2403
  %2499 = vmatprep.subr.bf16.mxu0 0
  %2500 = vmatpush1.bf16.msra.mxu0 %v2402
  %2501 = vmatprep.subr.bf16.mxu0 0
  %2502 = vmatpush1.bf16.msra.mxu0 %v2401
  %2503 = vmatprep.subr.bf16.mxu0 0
  %2504 = vmatpush1.bf16.msra.mxu0 %v2400
  %2505 = vmatprep.subr.bf16.mxu0 0
  %2506 = vmatpush2.bf16.msra.mxu0 %v2415
  %2507 = vmatprep.subr.bf16.mxu0 0
  %2508 = vmatpush2.bf16.msra.mxu0 %v2414
  %2509 = vmatprep.subr.bf16.mxu0 0
  %2510 = vmatpush2.bf16.msra.mxu0 %v2413
  %2511 = vmatprep.subr.bf16.mxu0 0
  %2512 = vmatpush2.bf16.msra.mxu0 %v2412
  %2513 = vmatprep.subr.bf16.mxu0 0
  %2514 = vmatpush2.bf16.msra.mxu0 %v2411
  %2515 = vmatprep.subr.bf16.mxu0 0
  %2516 = vmatpush2.bf16.msra.mxu0 %v2410
  %2517 = vmatprep.subr.bf16.mxu0 0
  %2518 = vmatpush2.bf16.msra.mxu0 %v2409
  %2519 = vmatprep.subr.bf16.mxu0 0
  %2520 = vmatpush2.bf16.msra.mxu0 %v2408
  %2521 = vmatprep.mubr.bf16.mxu0 %v2184
  %2522 = vmatmul.mubr.bf16.gmra.mxu0 %v2173
  %v2523 = vpop.f32.mrf.mxu0
  %v2524 = vadd.f32 %v2483, %v2523
  %v2525 = vpop.f32.mrf.mxu0
  %v2526 = vpop.f32.mrf.mxu0
  %v2527 = vadd.f32 %v2486, %v2526
  %v2528 = vpop.f32.mrf.mxu0
  %2529 = vdwg.mxu0
  %v2530 = vmax.f32 %v2524, 0.0
  %v2531 = vmax.f32 %v2527, 0.0
  %v2532 = vpack.c.bf16 %v2531, %v2530
  %v2533 = vld [vmem:[%s7] sm:$0xf]
  %v2534 = vld [vmem:[%s7 + $0x4] sm:$0xf]
  %v2535 = vld [vmem:[%s7 + $0x8] sm:$0xf]
  %v2536 = vld [vmem:[%s7 + $0xc] sm:$0xf]
  %v2537 = vld [vmem:[%s7 + $0x10] sm:$0xf]
  %v2538 = vld [vmem:[%s7 + $0x14] sm:$0xf]
  %v2539 = vld [vmem:[%s7 + $0x18] sm:$0xf]
  %v2540 = vld [vmem:[%s7 + $0x1c] sm:$0xf]
  %v2541 = vld [vmem:[%s7 + $0x20] sm:$0xf]
  %v2542 = vld [vmem:[%s7 + $0x24] sm:$0xf]
  %v2543 = vld [vmem:[%s7 + $0x28] sm:$0xf]
  %v2544 = vld [vmem:[%s7 + $0x2c] sm:$0xf]
  %v2545 = vld [vmem:[%s7 + $0x30] sm:$0xf]
  %v2546 = vld [vmem:[%s7 + $0x34] sm:$0xf]
  %v2547 = vld [vmem:[%s7 + $0x38] sm:$0xf]
  %v2548 = vld [vmem:[%s7 + $0x3c] sm:$0xf]
  %v2549 = vld [vmem:[%s8] sm:$0x1]
  %v2551 = vlaneseq
  %v2552 = vshrl.u32 %v2551, 7
  %v2553 = vsub.s32 0, %v2552
  %v2554 = vrot.slane %v2549, %v2553
  %v2572 = vunpack.c.l.b16 %v2533
  %v2573 = vunpack.c.l.b16 %v2534
  %v2574 = vunpack.c.l.b16 %v2535
  %v2575 = vunpack.c.l.b16 %v2536
  %v2576 = vunpack.c.l.b16 %v2537
  %v2577 = vunpack.c.l.b16 %v2538
  %v2578 = vunpack.c.l.b16 %v2539
  %v2579 = vunpack.c.l.b16 %v2540
  %v2580 = vunpack.c.l.b16 %v2541
  %v2581 = vunpack.c.l.b16 %v2542
  %v2582 = vunpack.c.l.b16 %v2543
  %v2583 = vunpack.c.l.b16 %v2544
  %v2584 = vunpack.c.l.b16 %v2545
  %v2585 = vunpack.c.l.b16 %v2546
  %v2586 = vunpack.c.l.b16 %v2547
  %v2587 = vunpack.c.l.b16 %v2548
  %v2588 = vpack.c.b16 %v2573, %v2572
  %v2589 = vpack.c.b16 %v2575, %v2574
  %v2590 = vpack.c.b16 %v2577, %v2576
  %v2591 = vpack.c.b16 %v2579, %v2578
  %v2592 = vpack.c.b16 %v2581, %v2580
  %v2593 = vpack.c.b16 %v2583, %v2582
  %v2594 = vpack.c.b16 %v2585, %v2584
  %v2595 = vpack.c.b16 %v2587, %v2586
  %2604 = vmatprep.subr.bf16.mxu0 0
  %2605 = vmatpush1.bf16.msra.mxu0 %v2595
  %2606 = vmatprep.subr.bf16.mxu0 0
  %2607 = vmatpush1.bf16.msra.mxu0 %v2594
  %2608 = vmatprep.subr.bf16.mxu0 0
  %2609 = vmatpush1.bf16.msra.mxu0 %v2593
  %2610 = vmatprep.subr.bf16.mxu0 0
  %2611 = vmatpush1.bf16.msra.mxu0 %v2592
  %2612 = vmatprep.subr.bf16.mxu0 0
  %2613 = vmatpush1.bf16.msra.mxu0 %v2591
  %2614 = vmatprep.subr.bf16.mxu0 0
  %2615 = vmatpush1.bf16.msra.mxu0 %v2590
  %2616 = vmatprep.subr.bf16.mxu0 0
  %2617 = vmatpush1.bf16.msra.mxu0 %v2589
  %2618 = vmatprep.subr.bf16.mxu0 0
  %2619 = vmatpush1.bf16.msra.mxu0 %v2588
  %2620 = vmatprep.subr.bf16.mxu0 0
  %2621 = vmatpush2.bf16.msra.mxu0 0
  %2622 = vmatprep.subr.bf16.mxu0 0
  %2623 = vmatpush2.bf16.msra.mxu0 0
  %2624 = vmatprep.subr.bf16.mxu0 0
  %2625 = vmatpush2.bf16.msra.mxu0 0
  %2626 = vmatprep.subr.bf16.mxu0 0
  %2627 = vmatpush2.bf16.msra.mxu0 0
  %2628 = vmatprep.subr.bf16.mxu0 0
  %2629 = vmatpush2.bf16.msra.mxu0 0
  %2630 = vmatprep.subr.bf16.mxu0 0
  %2631 = vmatpush2.bf16.msra.mxu0 0
  %2632 = vmatprep.subr.bf16.mxu0 0
  %2633 = vmatpush2.bf16.msra.mxu0 0
  %2634 = vmatprep.subr.bf16.mxu0 0
  %2635 = vmatpush2.bf16.msra.mxu0 0
  %2636 = vmatprep.mubr.bf16.mxu0 0
  %2637 = vmatmul.mubr.bf16.gmra.mxu0 %v2532
  %v2638 = vpop.f32.mrf.mxu0
  %v2639 = vadd.f32 %v2554, %v2638
  %v2640 = vpop.f32.mrf.mxu0
  %v2641 = vpop.f32.mrf.mxu0
  %v2642 = vadd.f32 %v2554, %v2641
  %v2643 = vpop.f32.mrf.mxu0
  %2644 = vdwg.mxu0
  %2645 = vmax.xlane.f32.xlu0 %v2639
  %v2646 = vpop.xlane.xlu0 %2645
  %2647 = vmax.xlane.f32.xlu0 %v2642
  %v2648 = vpop.xlane.xlu0 %2647
  %v2649 = vsub.f32 %v2639, %v2646
  %v2650 = vsub.f32 %v2642, %v2648
  %v2651 = vmul.f32 %v2649, 1.442695
  %v2652 = vpow.pop %v2651
  %v2653 = vmul.f32 %v2650, 1.442695
  %v2654 = vpow.pop %v2653
  %2655 = vadd.xlane.f32.xlu0 %v2652
  %v2656 = vpop.xlane.xlu0 %2655
  %2657 = vadd.xlane.f32.xlu0 %v2654
  %v2658 = vpop.xlane.xlu0 %2657
  %v2659 = vlog2.pop %v2656
  %v2660 = vmul.f32 %v2659, 0.6931472
  %v2661 = vlog2.pop %v2658
  %v2662 = vmul.f32 %v2661, 0.6931472
  %v2663 = vsub.f32 %v2649, %v2660
  %v2664 = vsub.f32 %v2650, %v2662
  %2665 = vst [vmem:[%s9] sm:$0xff] %v2663
  %2666 = vst [vmem:[%s9 + $0x8] sm:$0xff] %v2664
  // Predicated region
  $region38: #{net_forward.1} parent=0 // pred_check
    _
  $region39: #{net_forward.1} parent=0 // pred_check_branch
    %2668 = sbr.rel (0) target = $region41
  $region40: #{net_forward.1} parent=0 // pred_region
    _
  $region41: #{net_forward.1} parent=0 // pred_fallthru
    _
  // Predicated region
  $region42: #{net_forward.1} parent=0 // pred_check
    _
  $region43: #{net_forward.1} parent=0 // pred_check_branch
    %2670 = sbr.rel (0) target = $region45
  $region44: #{net_forward.1} parent=0 // pred_region
    _
  $region45: #{net_forward.1} parent=0 // pred_fallthru
    _

</llo_original>
